<compile_context>
chip_gen: v5e
topology: v5e:2x2
jax: 0.10.0
libtpu: 0.0.40
codegen_flags: <defaults>
</compile_context>

<pallas_src>
import math

import numpy as np
import jax
import jax.numpy as jnp
from jax import lax
from jax.experimental import pallas as pl
from jax.experimental.pallas import tpu as pltpu


SEQ_PAD = 128           # sequence padding bucket (sublane-aligned)
STREAM_TILE_MAX = 512   # max sequence tile for the streaming kernels (qkv/linear/stats)
ATTN_TILE_MAX = 256     # max TQ / TK for the attention grid

_VMEM_LIMIT_CACHE = None


def _vmem_limit_bytes():
    """Generation-aware VMEM budget (~48 MiB on v7x, ~100 MiB on v5e/v6e)."""
    global _VMEM_LIMIT_CACHE
    if _VMEM_LIMIT_CACHE is None:
        try:
            cap = pltpu.get_tpu_info().vmem_capacity_bytes
        except Exception:
            cap = 128 * 1024 * 1024
        _VMEM_LIMIT_CACHE = int(min(max(cap - 16 * 1024 * 1024, 32 * 1024 * 1024),
                                    100 * 1024 * 1024))
    return _VMEM_LIMIT_CACHE


def _pad_seq(x, block=SEQ_PAD):
    """Zero-pad the sequence axis (axis=1) up to a multiple of `block`."""
    s = x.shape[1]
    s_pad = max(block, ((s + block - 1) // block) * block)
    if s_pad != s:
        x = jnp.pad(x, ((0, 0), (0, s_pad - s), (0, 0)))
    return x, s_pad


def _pick_tile(s_pad, max_tile):
    """Largest 128-multiple <= max_tile that divides s_pad (s_pad is a 128-multiple)."""
    for t in range(min(max_tile, s_pad), 127, -128):
        if s_pad % t == 0:
            return t
    return min(s_pad, 128)


def _layer_norm(h, g, b):
    mu = jnp.mean(h, axis=-1, keepdims=True)
    var = jnp.mean(jnp.square(h - mu), axis=-1, keepdims=True)
    return (h - mu) * lax.rsqrt(var + 1e-5) * g + b


# --------------------------------------------------------------------------
# Kernel 1: pre-LN + fused QKV projection (sequence-tiled, resident bf16 weight)
# --------------------------------------------------------------------------
def _qkv_kernel(x_ref, ln1g_ref, ln1b_ref, wqkv_ref, bqkv_ref, qkv_ref):
    x = x_ref[0].astype(jnp.float32)                         # (TS, D)
    h = _layer_norm(x, ln1g_ref[...], ln1b_ref[...])         # f32 LN
    y = jnp.dot(h.astype(jnp.bfloat16), wqkv_ref[...],       # one (TS,D)x(D,3D) MXU op
                preferred_element_type=jnp.float32) + bqkv_ref[...]
    qkv_ref[0] = y.astype(qkv_ref.dtype)                     # single lane-dense store


# --------------------------------------------------------------------------
# Kernel 2: flash attention (online softmax over KV blocks) + fused epilogue
#           (out-proj + residual + LN2 + GELU MLP) on the last KV step.
# --------------------------------------------------------------------------
def _attn_mlp_kernel(kbias_ref, x_ref, q_ref, k_ref, v_ref, wo_ref, bo_ref,
                     ln2g_ref, ln2b_ref, w1_ref, c1_ref, w2_ref, c2_ref,
                     o_ref, m_sc, l_sc, acc_sc):
    ki = pl.program_id(1)

    @pl.when(ki == 0)
    def _():
        m_sc[...] = jnp.full(m_sc.shape, -jnp.inf, dtype=m_sc.dtype)
        l_sc[...] = jnp.zeros(l_sc.shape, dtype=l_sc.dtype)
        acc_sc[...] = jnp.zeros(acc_sc.shape, dtype=acc_sc.dtype)

    q = q_ref[0]                                             # (TQ, D) bf16, pre-scaled
    k = k_ref[0]                                             # (TK, D) bf16
    # TODO(synk): if the Mosaic dump shows an XLU transpose per (qi,ki) step for this
    # NT dot, store K pre-transposed (D-major) in stage 1 instead.
    s = lax.dot_general(q, k, (((1,), (1,)), ((), ())),
                        preferred_element_type=jnp.float32)
    s = s + kbias_ref[...]                                   # additive key-padding mask

    m_prev = m_sc[...]
    m_new = jnp.maximum(m_prev, jnp.max(s, axis=-1, keepdims=True))
    alpha = jnp.exp(m_prev - m_new)
    p = jnp.exp(s - m_new)
    l_sc[...] = alpha * l_sc[...] + jnp.sum(p, axis=-1, keepdims=True)
    acc_sc[...] = alpha * acc_sc[...] + jnp.dot(
        p.astype(jnp.bfloat16), v_ref[0], preferred_element_type=jnp.float32)
    m_sc[...] = m_new

    @pl.when(ki == pl.num_programs(1) - 1)
    def _():
        ctx = acc_sc[...] * pl.reciprocal(l_sc[...], approx=True)
        x = x_ref[0].astype(jnp.float32)
        y = x + jnp.dot(ctx.astype(jnp.bfloat16), wo_ref[...],
                        preferred_element_type=jnp.float32) + bo_ref[...]
        h2 = _layer_norm(y, ln2g_ref[...], ln2b_ref[...])
        # TODO(synk): for very large D on v7x (64 MiB VMEM) tile the 4*D MLP hidden dim
        # (emit_pipeline over (D,Tm)/(Tm,D) weight slabs) instead of resident w1/w2.
        u = jnp.dot(h2.astype(jnp.bfloat16), w1_ref[...],
                    preferred_element_type=jnp.float32) + c1_ref[...]
        u = jax.nn.gelu(u, approximate=True)
        y = y + jnp.dot(u.astype(jnp.bfloat16), w2_ref[...],
                        preferred_element_type=jnp.float32) + c2_ref[...]
        o_ref[0] = y.astype(o_ref.dtype)


class PallasTransformerBlock:
    """Deterministically-initialized synthetic transformer block (hidden_size=D)."""

    def __init__(self, key, hidden_size, mlp_ratio=4):
        self.hidden_size = hidden_size
        d, m = hidden_size, hidden_size * mlp_ratio
        ks = jax.random.split(key, 8)
        s = 1.0 / math.sqrt(d)
        sm_scale = 1.0 / math.sqrt(d)
        f32, bf16 = jnp.float32, jnp.bfloat16
        wq = s * jax.random.normal(ks[0], (d, d), f32)
        wk = s * jax.random.normal(ks[1], (d, d), f32)
        wv = s * jax.random.normal(ks[2], (d, d), f32)
        bq = jnp.zeros((1, d), f32)
        bk = jnp.zeros((1, d), f32)
        bv = jnp.zeros((1, d), f32)
        # Fuse QKV into one (D, 3D) bf16 weight; fold the softmax scale into the
        # Q columns (and Q bias) so the attention kernel does no per-step scaling.
        wqkv = jnp.concatenate([wq * sm_scale, wk, wv], axis=1).astype(bf16)
        bqkv = jnp.concatenate([bq * sm_scale, bk, bv], axis=1)
        self.params = dict(
            ln1_g=jnp.ones((1, d), f32), ln1_b=jnp.zeros((1, d), f32),
            wqkv=wqkv, bqkv=bqkv,
            wo=(s * jax.random.normal(ks[3], (d, d), f32)).astype(bf16),
            bo=jnp.zeros((1, d), f32),
            ln2_g=jnp.ones((1, d), f32), ln2_b=jnp.zeros((1, d), f32),
            w1=(s * jax.random.normal(ks[4], (d, m), f32)).astype(bf16),
            c1=0.01 * jax.random.normal(ks[5], (1, m), f32),
            w2=((1.0 / math.sqrt(m)) * jax.random.normal(ks[6], (m, d), f32)).astype(bf16),
            c2=0.01 * jax.random.normal(ks[7], (1, d), f32),
        )

    # --- stage 1: LN1 + fused QKV, tiled over the sequence ------------------
    def _qkv(self, x_pad):
        b, s_pad, d = x_pad.shape
        p = self.params
        ts = _pick_tile(s_pad, STREAM_TILE_MAX)
        row = lambda i: (0, i, 0)
        const = lambda i: (0, 0)
        wargs = (p["ln1_g"], p["ln1_b"], p["wqkv"], p["bqkv"])
        in_specs = ([pl.BlockSpec((1, ts, d), row)]
                    + [pl.BlockSpec(w.shape, const) for w in wargs])
        return pl.pallas_call(
            _qkv_kernel,
            out_shape=jax.ShapeDtypeStruct((b, s_pad, 3 * d), jnp.bfloat16),
            grid_spec=pltpu.PrefetchScalarGridSpec(
                num_scalar_prefetch=0, grid=(s_pad // ts,),
                in_specs=in_specs,
                out_specs=pl.BlockSpec((1, ts, 3 * d), row)),
            compiler_params=pltpu.CompilerParams(
                dimension_semantics=("parallel",),
                vmem_limit_bytes=_vmem_limit_bytes()),
        )(x_pad, *wargs)

    # --- stage 2: flash attention + fused out-proj/LN2/MLP epilogue ---------
    def _attn_mlp(self, x_pad, qkv, seq_len, out_dtype):
        b, s_pad, d = x_pad.shape
        p = self.params
        tile = _pick_tile(s_pad, ATTN_TILE_MAX)
        nq = s_pad // tile
        nk = s_pad // tile
        qrow = lambda qi, ki: (0, qi, 0)   # x / q / output blocks
        kcol = lambda qi, ki: (0, ki, 1)   # K columns of the fused qkv tensor
        vcol = lambda qi, ki: (0, ki, 2)   # V columns of the fused qkv tensor
        kmsk = lambda qi, ki: (0, ki)
        const = lambda qi, ki: (0, 0)
        wargs = (p["wo"], p["bo"], p["ln2_g"], p["ln2_b"], p["w1"], p["c1"],
                 p["w2"], p["c2"])
        # Additive key-padding bias: 0 for valid keys, -1e30 for padded keys.
        kbias = jnp.where(jnp.arange(s_pad) < seq_len, 0.0, -1e30)
        kbias = kbias.astype(jnp.float32).reshape(1, s_pad)
        in_specs = ([pl.BlockSpec((1, tile), kmsk),
                     pl.BlockSpec((1, tile, d), qrow),   # x (residual)
                     pl.BlockSpec((1, tile, d), qrow),   # q slice of qkv
                     pl.BlockSpec((1, tile, d), kcol),   # k slice of qkv
                     pl.BlockSpec((1, tile, d), vcol)]   # v slice of qkv
                    + [pl.BlockSpec(w.shape, const) for w in wargs])
        out_spec = pl.BlockSpec((1, tile, d), qrow)
        return pl.pallas_call(
            _attn_mlp_kernel,
            out_shape=jax.ShapeDtypeStruct((b, s_pad, d), out_dtype),
            grid_spec=pltpu.PrefetchScalarGridSpec(
                num_scalar_prefetch=0, grid=(nq, nk),
                in_specs=in_specs, out_specs=out_spec,
                scratch_shapes=[pltpu.VMEM((tile, 1), jnp.float32),
                                pltpu.VMEM((tile, 1), jnp.float32),
                                pltpu.VMEM((tile, d), jnp.float32)]),
            compiler_params=pltpu.CompilerParams(
                dimension_semantics=("parallel", "arbitrary"),
                vmem_limit_bytes=_vmem_limit_bytes()),
        )(kbias, x_pad, qkv, qkv, qkv, *wargs)

    def __call__(self, hidden_states, **kwargs):
        b, s, d = hidden_states.shape
        assert b == 1, "FastCache semantics (squeeze(0), dim-1 index ops) imply batch=1"
        x_pad, _ = _pad_seq(hidden_states)
        qkv = self._qkv(x_pad)
        out = self._attn_mlp(x_pad, qkv, s, hidden_states.dtype)
        return out[:, :s, :]


# --------------------------------------------------------------------------
# cache_projection kernel: y = x @ W_t + b, W_t = W.T pre-transposed (in, out) bf16
# --------------------------------------------------------------------------
def _linear_kernel(x_ref, wt_ref, b_ref, o_ref):
    x = x_ref[0].astype(jnp.bfloat16)                        # (TS, Din)
    y = jnp.dot(x, wt_ref[...], preferred_element_type=jnp.float32) + b_ref[...]
    o_ref[0] = y.astype(o_ref.dtype)


def pallas_linear(x, weight_t, bias):
    b, s, din = x.shape
    dout = weight_t.shape[1]
    x_pad, s_pad = _pad_seq(x)
    ts = _pick_tile(s_pad, STREAM_TILE_MAX)
    row = lambda i: (0, i, 0)
    out = pl.pallas_call(
        _linear_kernel,
        out_shape=jax.ShapeDtypeStruct((b, s_pad, dout), x.dtype),
        grid_spec=pltpu.PrefetchScalarGridSpec(
            num_scalar_prefetch=0, grid=(s_pad // ts,),
            in_specs=[pl.BlockSpec((1, ts, din), row),
                      pl.BlockSpec((din, dout), lambda i: (0, 0)),
                      pl.BlockSpec((1, dout), lambda i: (0, 0))],
            out_specs=pl.BlockSpec((1, ts, dout), row)),
        compiler_params=pltpu.CompilerParams(
            dimension_semantics=("parallel",),
            vmem_limit_bytes=_vmem_limit_bytes()),
    )(x_pad, weight_t, bias)
    return out[:, :s, :]


# --------------------------------------------------------------------------
# Cache-statistics kernel (tiled over S, fully parallel — partial sums per token):
#   sal  = per-token max|Δ|
#   dsqt = per-token sum(Δ²)     (XLA reduces to ||Δ||_F²)
#   psqt = per-token sum(prev²)  (XLA reduces to ||prev||_F²)
# --------------------------------------------------------------------------
def _stats_kernel(cur_ref, prev_ref, sal_ref, dsqt_ref, psqt_ref):
    c = cur_ref[0].astype(jnp.float32)                       # (TS, D)
    p = prev_ref[0].astype(jnp.float32)
    d = c - p
    sal_ref[...] = jnp.max(jnp.abs(d), axis=-1)[None, :]     # (1, TS)
    dsqt_ref[...] = jnp.sum(d * d, axis=-1)[None, :]
    psqt_ref[...] = jnp.sum(p * p, axis=-1)[None, :]


def pallas_cache_stats(cur, prev):
    """One fully-parallel tiled pass; returns device arrays (sal, dsq, psq)."""
    b, s, d = cur.shape
    cur_p, s_pad = _pad_seq(cur)
    prev_p, _ = _pad_seq(prev)
    ts = _pick_tile(s_pad, STREAM_TILE_MAX)
    row3 = lambda i: (0, i, 0)
    row2 = lambda i: (0, i)
    sal, dsqt, psqt = pl.pallas_call(
        _stats_kernel,
        out_shape=(jax.ShapeDtypeStruct((b, s_pad), jnp.float32),
                   jax.ShapeDtypeStruct((1, s_pad), jnp.float32),
                   jax.ShapeDtypeStruct((1, s_pad), jnp.float32)),
        grid_spec=pltpu.PrefetchScalarGridSpec(
            num_scalar_prefetch=0, grid=(s_pad // ts,),
            in_specs=[pl.BlockSpec((1, ts, d), row3),
                      pl.BlockSpec((1, ts, d), row3)],
            out_specs=(pl.BlockSpec((1, ts), row2),
                       pl.BlockSpec((1, ts), row2),
                       pl.BlockSpec((1, ts), row2))),
        compiler_params=pltpu.CompilerParams(
            dimension_semantics=("parallel",),
            vmem_limit_bytes=_vmem_limit_bytes()),
    )(cur_p, prev_p)
    # Padded tokens contribute exactly 0 to both sums (zero-padded cur & prev).
    return sal[0, :s], jnp.sum(dsqt), jnp.sum(psqt)


# --------------------------------------------------------------------------
# FastCacheAccelerator / FastCacheTransformerWrapper (Python-level state & logic)
# --------------------------------------------------------------------------
class FastCacheAcceleratorPallas:
    def __init__(self, model, hidden_size, cache_ratio_threshold=0.05,
                 motion_threshold=0.1, significance_level=0.05,
                 cache_enabled=True, key=None):
        self.model = model
        self.cache_ratio_threshold = cache_ratio_threshold
        self.motion_threshold = motion_threshold
        self.significance_level = significance_level
        self.cache_enabled = cache_enabled
        self.prev_hidden_states = None
        self.bg_hidden_states = None
        self.cache_hits = 0
        self.total_steps = 0
        self.beta0 = 0.01
        self.beta1 = 0.5
        self.beta2 = -0.002
        self.beta3 = 5e-05
        self.layer_cache_hits = {}
        key = jax.random.PRNGKey(0) if key is None else key
        kw, kb = jax.random.split(key)
        bound = 1.0 / math.sqrt(hidden_size)
        # nn.Linear(hidden, hidden): weight is (out, in); pre-transpose once to (in, out)
        # so the MXU RHS is lane-major, and cast to bf16 once at init.
        w = jax.random.uniform(kw, (hidden_size, hidden_size), jnp.float32, -bound, bound)
        self.proj_weight_t = jnp.transpose(w).astype(jnp.bfloat16)
        self.proj_bias = jax.random.uniform(kb, (1, hidden_size), jnp.float32, -bound, bound)

    # ----- FastCache helpers -----
    def cache_projection(self, x):
        return pallas_linear(x, self.proj_weight_t, self.proj_bias)

    def get_adaptive_threshold(self, variance_score, timestep):
        normalized_timestep = timestep / 1000.0
        return (self.beta0 + self.beta1 * variance_score
                + self.beta2 * normalized_timestep
                + self.beta3 * normalized_timestep ** 2)

    def _final_threshold(self, delta, n, d, timestep):
        dof = n * d
        z = 1.96
        chi2_threshold = dof + z * math.sqrt(2 * dof)
        statistical_threshold = math.sqrt(chi2_threshold / dof)
        adaptive_threshold = self.get_adaptive_threshold(delta, timestep)
        return max(self.cache_ratio_threshold,
                   min(statistical_threshold, adaptive_threshold))

    # Standalone API methods (forward() uses a single fused stats pass instead).
    def compute_relative_change(self, current, previous):
        if previous is None:
            return float('inf')
        _, dsq, psq = pallas_cache_stats(current, previous)
        dsq, psq = float(dsq), float(psq)
        if psq == 0.0:
            return float('inf')
        return math.sqrt(dsq) / math.sqrt(psq)

    def should_use_cache(self, hidden_states, timestep):
        if not self.cache_enabled or self.prev_hidden_states is None:
            return False
        delta = self.compute_relative_change(hidden_states, self.prev_hidden_states)
        n, d = hidden_states.shape[1], hidden_states.shape[2]
        return delta <= self._final_threshold(delta, n, d, timestep)

    def compute_motion_saliency(self, hidden_states):
        if self.prev_hidden_states is None:
            return jnp.ones((hidden_states.shape[1],), jnp.float32)
        sal, _, _ = pallas_cache_stats(hidden_states, self.prev_hidden_states)
        mx = float(jnp.max(sal))
        return sal / mx if mx > 0 else sal

    # ----- forward -----
    def forward(self, hidden_states, timestep=None, use_cached_states=True,
                layer_idx=None, **kwargs):
        self.total_steps += 1

        # Cold cache (or caching disabled): run the full transformer block.
        if not self.cache_enabled or self.prev_hidden_states is None:
            if layer_idx is not None and layer_idx not in self.layer_cache_hits:
                self.layer_cache_hits[layer_idx] = 0
            output = self.model(hidden_states, **kwargs)
            self.prev_hidden_states = hidden_states
            if self.bg_hidden_states is None:
                self.bg_hidden_states = hidden_states
            return output

        # One stats kernel + ONE batched device->host transfer drives both the
        # cache decision and the motion-saliency split (deduplicated traffic).
        sal_dev, dsq_dev, psq_dev = pallas_cache_stats(hidden_states,
                                                       self.prev_hidden_states)
        sal_np, dsq, psq = jax.device_get((sal_dev, dsq_dev, psq_dev))
        dsq, psq = float(dsq), float(psq)
        delta = float('inf') if psq == 0.0 else math.sqrt(dsq) / math.sqrt(psq)

        # Cache hit: replace the block with the learned linear projection.
        # (Matches the reference: prev/bg state NOT updated on the hit path.)
        n, d = hidden_states.shape[1], hidden_states.shape[2]
        if use_cached_states and delta <= self._final_threshold(delta, n, d, timestep):
            self.cache_hits += 1
            if layer_idx is not None:
                self.layer_cache_hits[layer_idx] = self.layer_cache_hits.get(layer_idx, 0) + 1
            return self.cache_projection(hidden_states)

        # Motion-aware partial computation (saliency reuses the same stats pass).
        sal_max = float(sal_np.max())
        saliency = sal_np / sal_max if sal_max > 0 else sal_np
        motion_mask = saliency > self.motion_threshold
        if motion_mask.sum() / motion_mask.size > 0.5:
            output = self.model(hidden_states, **kwargs)
        else:
            # TODO(synk): data-dependent index_select/index_copy_ lengths are handled as
            # host-side gather/scatter; gathered blocks are zero-padded to 128-row
            # buckets inside the kernels so tiles stay fixed-shape and (8,128)-aligned.
            motion_indices = np.where(motion_mask)[0]
            static_indices = np.where(~motion_mask)[0]
            if len(motion_indices) > 0:
                motion_states = jnp.take(hidden_states, motion_indices, axis=1)
                motion_output = self.model(motion_states, **kwargs)
                static_states = jnp.take(hidden_states, static_indices, axis=1)
                static_output = self.cache_projection(static_states)
                output = hidden_states
                output = output.at[:, motion_indices, :].set(motion_output)
                output = output.at[:, static_indices, :].set(static_output)
            else:
                output = self.cache_projection(hidden_states)

        self.prev_hidden_states = hidden_states
        alpha = 0.9
        self.bg_hidden_states = alpha * self.bg_hidden_states + (1 - alpha) * hidden_states
        return output

    def get_cache_hit_ratio(self):
        return 0.0 if self.total_steps == 0 else self.cache_hits / self.total_steps


class FastCacheTransformerWrapper:
    """Pallas port of xfuser FastCacheTransformerWrapper."""

    def __init__(self, transformer_block, hidden_size,
                 cache_ratio_threshold=0.05, motion_threshold=0.1, key=None):
        self.transformer = transformer_block
        self.accelerator = FastCacheAcceleratorPallas(
            transformer_block, hidden_size,
            cache_ratio_threshold=cache_ratio_threshold,
            motion_threshold=motion_threshold, key=key)

    def __call__(self, hidden_states, timestep=None, **kwargs):
        return self.accelerator.forward(hidden_states, timestep=timestep, **kwargs)


if __name__ == "__main__":
    key = jax.random.PRNGKey(0)
    k_block, k_proj, k_x, k_noise = jax.random.split(key, 4)

    # Lane-dense demo shapes: D = 128 (one full lane), S = 256 (two 128-row buckets).
    B, S, D = 1, 256, 128
    block = PallasTransformerBlock(k_block, D)
    wrapper = FastCacheTransformerWrapper(block, D, key=k_proj)

    x0 = jax.random.normal(k_x, (B, S, D), jnp.float32)

    # Step 1: cold cache -> full transformer block (fused QKV + flash-attn/MLP kernels).
    out0 = wrapper(x0, timestep=900.0, layer_idx=0)

    # Step 2: nearly-identical input -> cache hit -> projection kernel.
    x1 = x0 + 1e-3 * jax.random.normal(k_noise, (B, S, D), jnp.float32)
    out1 = wrapper(x1, timestep=800.0, layer_idx=0)

    # Step 3: 16 tokens change a lot -> motion/static split path
    #         (block kernels on motion tokens + projection kernel on static tokens).
    x2 = x1.at[:, :16, :].add(2.0)
    out2 = wrapper(x2, timestep=700.0, layer_idx=0)

    jax.block_until_ready((out0, out1, out2))
    assert out0.shape == (B, S, D)
    assert out1.shape == (B, S, D)
    assert out2.shape == (B, S, D)
    print("KERNEL_OK")
</pallas_src>

<mosaic_0001>
module attributes {stable_mosaic.version = 11 : i64} {
  func.func @_qkv_kernel(%arg0: i32, %arg1: memref<1x256x128xf32, #tpu.memory_space<vmem>>, %arg2: memref<1x128xf32, #tpu.memory_space<vmem>>, %arg3: memref<1x128xf32, #tpu.memory_space<vmem>>, %arg4: memref<128x384xbf16, #tpu.memory_space<vmem>>, %arg5: memref<1x384xf32, #tpu.memory_space<vmem>>, %arg6: memref<1x256x384xbf16, #tpu.memory_space<vmem>>) attributes {dimension_semantics = [#tpu.dimension_semantics<parallel>], iteration_bounds = array<i64: 1>, scalar_prefetch = 0 : i64, scratch_operands = 0 : i64, tpu.core_type = #tpu.core_type<tc>, window_params = [{transform_indices = @transform_0, window_bounds = array<i64: 1, 256, 128>}, {pipeline_mode = #tpu.pipeline_mode<synchronous>, transform_indices = @transform_1, window_bounds = array<i64: 1, 128>}, {pipeline_mode = #tpu.pipeline_mode<synchronous>, transform_indices = @transform_2, window_bounds = array<i64: 1, 128>}, {pipeline_mode = #tpu.pipeline_mode<synchronous>, transform_indices = @transform_3, window_bounds = array<i64: 128, 384>}, {pipeline_mode = #tpu.pipeline_mode<synchronous>, transform_indices = @transform_4, window_bounds = array<i64: 1, 384>}, {transform_indices = @transform_5, window_bounds = array<i64: 1, 256, 384>}]} {
    %c0 = arith.constant 0 : index
    %c0_0 = arith.constant 0 : index
    %c0_1 = arith.constant 0 : index
    %0 = vector.load %arg1[%c0, %c0_0, %c0_1] : memref<1x256x128xf32, #tpu.memory_space<vmem>>, vector<1x256x128xf32>
    %1 = vector.shape_cast %0 : vector<1x256x128xf32> to vector<256x128xf32>
    %c0_2 = arith.constant 0 : index
    %c0_3 = arith.constant 0 : index
    %2 = vector.load %arg2[%c0_2, %c0_3] : memref<1x128xf32, #tpu.memory_space<vmem>>, vector<1x128xf32>
    %c0_4 = arith.constant 0 : index
    %c0_5 = arith.constant 0 : index
    %3 = vector.load %arg3[%c0_4, %c0_5] : memref<1x128xf32, #tpu.memory_space<vmem>>, vector<1x128xf32>
    %cst = arith.constant dense<0.000000e+00> : vector<256xf32>
    %4 = vector.multi_reduction <add>, %1, %cst [1] : vector<256x128xf32> to vector<256xf32>
    %5 = vector.shape_cast %4 : vector<256xf32> to vector<256x1xf32>
    %cst_6 = arith.constant 1.280000e+02 : f32
    %6 = vector.broadcast %cst_6 : f32 to vector<256x1xf32>
    %7 = arith.divf %5, %6 : vector<256x1xf32>
    %8 = vector.broadcast %7 : vector<256x1xf32> to vector<256x128xf32>
    %9 = arith.subf %1, %8 : vector<256x128xf32>
    %10 = arith.mulf %9, %9 : vector<256x128xf32>
    %cst_7 = arith.constant dense<0.000000e+00> : vector<256xf32>
    %11 = vector.multi_reduction <add>, %10, %cst_7 [1] : vector<256x128xf32> to vector<256xf32>
    %12 = vector.shape_cast %11 : vector<256xf32> to vector<256x1xf32>
    %cst_8 = arith.constant 1.280000e+02 : f32
    %13 = vector.broadcast %cst_8 : f32 to vector<256x1xf32>
    %14 = arith.divf %12, %13 : vector<256x1xf32>
    %15 = vector.broadcast %7 : vector<256x1xf32> to vector<256x128xf32>
    %16 = arith.subf %1, %15 : vector<256x128xf32>
    %cst_9 = arith.constant 9.99999974E-6 : f32
    %17 = vector.broadcast %cst_9 : f32 to vector<256x1xf32>
    %18 = arith.addf %14, %17 : vector<256x1xf32>
    %19 = math.rsqrt %18 : vector<256x1xf32>
    %20 = vector.broadcast %19 : vector<256x1xf32> to vector<256x128xf32>
    %21 = arith.mulf %16, %20 : vector<256x128xf32>
    %22 = vector.broadcast %2 : vector<1x128xf32> to vector<256x128xf32>
    %23 = arith.mulf %21, %22 : vector<256x128xf32>
    %24 = vector.broadcast %3 : vector<1x128xf32> to vector<256x128xf32>
    %25 = arith.addf %23, %24 : vector<256x128xf32>
    %26 = arith.truncf %25 : vector<256x128xf32> to vector<256x128xbf16>
    %c0_10 = arith.constant 0 : index
    %c0_11 = arith.constant 0 : index
    %27 = vector.load %arg4[%c0_10, %c0_11] : memref<128x384xbf16, #tpu.memory_space<vmem>>, vector<128x384xbf16>
    %cst_12 = arith.constant dense<0.000000e+00> : vector<256x384xf32>
    %28 = tpu.matmul %26, %27, %cst_12 {dimension_numbers = #tpu.dot_dimension_numbers<[1], [0], [0], [1], [0, 0, 1, 1], [], []>} : vector<256x128xbf16>, vector<128x384xbf16>, vector<256x384xf32> -> vector<256x384xf32>
    %c0_13 = arith.constant 0 : index
    %c0_14 = arith.constant 0 : index
    %29 = vector.load %arg5[%c0_13, %c0_14] : memref<1x384xf32, #tpu.memory_space<vmem>>, vector<1x384xf32>
    %30 = vector.broadcast %29 : vector<1x384xf32> to vector<256x384xf32>
    %31 = arith.addf %28, %30 : vector<256x384xf32>
    %32 = arith.truncf %31 : vector<256x384xf32> to vector<256x384xbf16>
    %c0_15 = arith.constant 0 : index
    %c0_16 = arith.constant 0 : index
    %c0_17 = arith.constant 0 : index
    %33 = vector.load %arg6[%c0_15, %c0_16, %c0_17] : memref<1x256x384xbf16, #tpu.memory_space<vmem>>, vector<1x256x384xbf16>
    %34 = vector.shape_cast %33 : vector<1x256x384xbf16> to vector<256x384xbf16>
    %35 = vector.shape_cast %32 : vector<256x384xbf16> to vector<1x256x384xbf16>
    tpu.vector_store %arg6[%c0_15, %c0_16, %c0_17], %35 {strides = array<i32>} : memref<1x256x384xbf16, #tpu.memory_space<vmem>>, vector<1x256x384xbf16>,
    return
  }
  func.func @transform_0(%arg0: i32) -> (i32, i32, i32) {
    %c0_i32 = arith.constant 0 : i32
    %c0_i32_0 = arith.constant 0 : i32
    %c0_i32_1 = arith.constant 0 : i32
    return %c0_i32, %arg0, %c0_i32_0 : i32, i32, i32
  }
  func.func @transform_1(%arg0: i32) -> (i32, i32) {
    %c0_i32 = arith.constant 0 : i32
    %c0_i32_0 = arith.constant 0 : i32
    %c0_i32_1 = arith.constant 0 : i32
    return %c0_i32, %c0_i32_0 : i32, i32
  }
  func.func @transform_2(%arg0: i32) -> (i32, i32) {
    %c0_i32 = arith.constant 0 : i32
    %c0_i32_0 = arith.constant 0 : i32
    %c0_i32_1 = arith.constant 0 : i32
    return %c0_i32, %c0_i32_0 : i32, i32
  }
  func.func @transform_3(%arg0: i32) -> (i32, i32) {
    %c0_i32 = arith.constant 0 : i32
    %c0_i32_0 = arith.constant 0 : i32
    %c0_i32_1 = arith.constant 0 : i32
    return %c0_i32, %c0_i32_0 : i32, i32
  }
  func.func @transform_4(%arg0: i32) -> (i32, i32) {
    %c0_i32 = arith.constant 0 : i32
    %c0_i32_0 = arith.constant 0 : i32
    %c0_i32_1 = arith.constant 0 : i32
    return %c0_i32, %c0_i32_0 : i32, i32
  }
  func.func @transform_5(%arg0: i32) -> (i32, i32, i32) {
    %c0_i32 = arith.constant 0 : i32
    %c0_i32_0 = arith.constant 0 : i32
    %c0_i32_1 = arith.constant 0 : i32
    return %c0_i32, %arg0, %c0_i32_0 : i32, i32, i32
  }
}

</mosaic_0001>

<llo_original>
// kernel: tpu_custom_call.1
$region0: #{tpu_custom_call.1}
  #allocation0 [shape = 'u32[]', space=smem, size = 0x4, offset = 0x4, fixed_abs, tag = 'smem constant byte address 0x4 - core index']
  #allocation1 [shape = 'u32[72,128]{1,0:T(1,128)}', space=vmem, size = 0x9000, scoped, tag = 'internal scratch']
  %s0 = inlined_call_operand.hbm [shape: f32[1,256,128], index: 0, kind: input, shape index: {}]
  %s1 = inlined_call_operand.hbm [shape: f32[1,128], index: 1, kind: input, shape index: {}]
  %s2 = inlined_call_operand.hbm [shape: f32[1,128], index: 2, kind: input, shape index: {}]
  %s3 = inlined_call_operand.hbm [shape: bf16[128,384], index: 3, kind: input, shape index: {}]
  %s4 = inlined_call_operand.vmem [shape: f32[1,384], index: 4, kind: input, shape index: {}]
  %s5 = inlined_call_operand.hbm [shape: bf16[1,256,384], index: 5, kind: output, shape index: {}]
  %s6 = sld [smem:[#allocation0]]
  $region46: #{tpu_custom_call.1} parent=0
    _
  %s8 = ssub.s32 1, %s6
  %s9 = scalar_select 0, %s8, %s6
  $region1: #{tpu_custom_call.1} parent=0
    #allocation2 [shape = 'u8[131072]{0}', space=vmem, size = 0x20000, scoped, tag = 'input window, operand 0, single buffered']
    #allocation3 [shape = 's32[1]{0}', space=sflag, size = 0x4, scoped, tag = 'scoped memory for tpu_custom_call.1']
    #allocation4 [shape = 's32[1]{0}', space=sflag, size = 0x4, scoped, tag = 'scoped memory for tpu_custom_call.1']
    #allocation5 [shape = 'u8[512]{0}', space=vmem, size = 0x400, scoped, tag = 'input window, operand 1, single buffered']
    #allocation6 [shape = 's32[1]{0}', space=sflag, size = 0x4, scoped, tag = 'scoped memory for tpu_custom_call.1']
    #allocation7 [shape = 'u8[512]{0}', space=vmem, size = 0x400, scoped, tag = 'input window, operand 2, single buffered']
    #allocation8 [shape = 'u8[98304]{0}', space=vmem, size = 0x18000, scoped, tag = 'input window, operand 3, single buffered']
    #allocation9 [shape = 's32[1]{0}', space=sflag, size = 0x4, scoped, tag = 'scoped memory for tpu_custom_call.1']
    #allocation10 [shape = 'u8[196608]{0}', space=vmem, size = 0x30000, scoped, tag = 'output window, operand 0, single buffered']
    %10 = vsyncpa [#allocation3], 0
    %11 = vsyncpa [#allocation6], 0
    %12 = vsyncpa [#allocation9], 0
    %13 = vsyncpa [#allocation4], 0
    // Predicated region
    $region2: #{tpu_custom_call.1} parent=1 // pred_check
      _
    $region3: #{tpu_custom_call.1} parent=1 // pred_check_branch
      %15 = sbr.rel (0) target = $region5
    $region4: #{tpu_custom_call.1} parent=1 // pred_region
      %17 = vsyncadd [#allocation3], 0
      %s18 = sshll.u32 %s0, 4
      %s19 = int_to_ptr.hbm [resolvable:$true] %s18
      %s20 = sshll.u32 [#allocation2], 4
      %s21 = int_to_ptr.vmem [resolvable:$true] %s20
      %26 = dma.hbm_to_vmem [thread:$0]  %s19, 4096, %s21, [#allocation3], 128, 128, 8
    $region5: #{tpu_custom_call.1} parent=1 // pred_fallthru
      _
    // Predicated region
    $region6: #{tpu_custom_call.1} parent=1 // pred_check
      _
    $region7: #{tpu_custom_call.1} parent=1 // pred_check_branch
      %28 = sbr.rel (0) target = $region9
    $region8: #{tpu_custom_call.1} parent=1 // pred_region
      %30 = vsyncadd [#allocation6], 0
      %s32 = sshll.u32 %s1, 4
      %s33 = int_to_ptr.hbm [resolvable:$true] %s32
      %s34 = sshll.u32 [#allocation5], 4
      %s35 = int_to_ptr.vmem [resolvable:$true] %s34
      %37 = dma.hbm_to_vmem [thread:$0]  %s33, 16, %s35, [#allocation6]
    $region9: #{tpu_custom_call.1} parent=1 // pred_fallthru
      _
    // Predicated region
    $region10: #{tpu_custom_call.1} parent=1 // pred_check
      _
    $region11: #{tpu_custom_call.1} parent=1 // pred_check_branch
      %39 = sbr.rel (0) target = $region13
    $region12: #{tpu_custom_call.1} parent=1 // pred_region
      %41 = vsyncadd [#allocation6], 0
      %s43 = sshll.u32 %s2, 4
      %s44 = int_to_ptr.hbm [resolvable:$true] %s43
      %s45 = sshll.u32 [#allocation7], 4
      %s46 = int_to_ptr.vmem [resolvable:$true] %s45
      %48 = dma.hbm_to_vmem [thread:$0]  %s44, 16, %s46, [#allocation6]
    $region13: #{tpu_custom_call.1} parent=1 // pred_fallthru
      _
    // Predicated region
    $region14: #{tpu_custom_call.1} parent=1 // pred_check
      _
    $region15: #{tpu_custom_call.1} parent=1 // pred_check_branch
      %50 = sbr.rel (0) target = $region17
    $region16: #{tpu_custom_call.1} parent=1 // pred_region
      %52 = vsyncadd [#allocation9], 0
      %s53 = sshll.u32 %s3, 4
      %s54 = int_to_ptr.hbm [resolvable:$true] %s53
      %s55 = sshll.u32 [#allocation8], 4
      %s56 = int_to_ptr.vmem [resolvable:$true] %s55
      %61 = dma.hbm_to_vmem [thread:$0]  %s54, 3072, %s56, [#allocation9], 192, 192, 12
    $region17: #{tpu_custom_call.1} parent=1 // pred_fallthru
      _
    // Predicated region
    $region18: #{tpu_custom_call.1} parent=1 // pred_check
      _
    $region19: #{tpu_custom_call.1} parent=1 // pred_check_branch
      %63 = sbr.rel (0) target = $region21
    $region20: #{tpu_custom_call.1} parent=1 // pred_region
      _
    $region21: #{tpu_custom_call.1} parent=1 // pred_fallthru
      _
    // Predicated region
    $region22: #{tpu_custom_call.1} parent=1 // pred_check
      _
    $region23: #{tpu_custom_call.1} parent=1 // pred_check_branch
      %65 = sbr.rel (0) target = $region25
    $region24: #{tpu_custom_call.1} parent=1 // pred_region
      %67 = dma.done [#allocation3], 4096
    $region25: #{tpu_custom_call.1} parent=1 // pred_fallthru
      _
    // Predicated region
    $region26: #{tpu_custom_call.1} parent=1 // pred_check
      _
    $region27: #{tpu_custom_call.1} parent=1 // pred_check_branch
      %69 = sbr.rel (0) target = $region29
    $region28: #{tpu_custom_call.1} parent=1 // pred_region
      %71 = dma.done [#allocation6], 16
    $region29: #{tpu_custom_call.1} parent=1 // pred_fallthru
      _
    // Predicated region
    $region30: #{tpu_custom_call.1} parent=1 // pred_check
      _
    $region31: #{tpu_custom_call.1} parent=1 // pred_check_branch
      %73 = sbr.rel (0) target = $region33
    $region32: #{tpu_custom_call.1} parent=1 // pred_region
      %75 = dma.done [#allocation6], 16
    $region33: #{tpu_custom_call.1} parent=1 // pred_fallthru
      _
    // Predicated region
    $region34: #{tpu_custom_call.1} parent=1 // pred_check
      _
    $region35: #{tpu_custom_call.1} parent=1 // pred_check_branch
      %77 = sbr.rel (0) target = $region37
    $region36: #{tpu_custom_call.1} parent=1 // pred_region
      %79 = dma.done [#allocation9], 3072
    $region37: #{tpu_custom_call.1} parent=1 // pred_fallthru
      _
    %v80 = vld [vmem:[#allocation2] sm:$0xff]
    %v81 = vld [vmem:[#allocation2 + $0x8] sm:$0xff]
    %v82 = vld [vmem:[#allocation2 + $0x10] sm:$0xff]
    %v83 = vld [vmem:[#allocation2 + $0x18] sm:$0xff]
    %v84 = vld [vmem:[#allocation2 + $0x20] sm:$0xff]
    %v85 = vld [vmem:[#allocation2 + $0x28] sm:$0xff]
    %v86 = vld [vmem:[#allocation2 + $0x30] sm:$0xff]
    %v87 = vld [vmem:[#allocation2 + $0x38] sm:$0xff]
    %v88 = vld [vmem:[#allocation2 + $0x40] sm:$0xff]
    %v89 = vld [vmem:[#allocation2 + $0x48] sm:$0xff]
    %v90 = vld [vmem:[#allocation2 + $0x50] sm:$0xff]
    %v91 = vld [vmem:[#allocation2 + $0x58] sm:$0xff]
    %v92 = vld [vmem:[#allocation2 + $0x60] sm:$0xff]
    %v93 = vld [vmem:[#allocation2 + $0x68] sm:$0xff]
    %v94 = vld [vmem:[#allocation2 + $0x70] sm:$0xff]
    %v95 = vld [vmem:[#allocation2 + $0x78] sm:$0xff]
    %v96 = vld [vmem:[#allocation2 + $0x80] sm:$0xff]
    %v97 = vld [vmem:[#allocation2 + $0x88] sm:$0xff]
    %v98 = vld [vmem:[#allocation2 + $0x90] sm:$0xff]
    %v99 = vld [vmem:[#allocation2 + $0x98] sm:$0xff]
    %v100 = vld [vmem:[#allocation2 + $0xa0] sm:$0xff]
    %v101 = vld [vmem:[#allocation2 + $0xa8] sm:$0xff]
    %v102 = vld [vmem:[#allocation2 + $0xb0] sm:$0xff]
    %v103 = vld [vmem:[#allocation2 + $0xb8] sm:$0xff]
    %v104 = vld [vmem:[#allocation2 + $0xc0] sm:$0xff]
    %v105 = vld [vmem:[#allocation2 + $0xc8] sm:$0xff]
    %v106 = vld [vmem:[#allocation2 + $0xd0] sm:$0xff]
    %v107 = vld [vmem:[#allocation2 + $0xd8] sm:$0xff]
    %v108 = vld [vmem:[#allocation2 + $0xe0] sm:$0xff]
    %v109 = vld [vmem:[#allocation2 + $0xe8] sm:$0xff]
    %v110 = vld [vmem:[#allocation2 + $0xf0] sm:$0xff]
    %v111 = vld [vmem:[#allocation2 + $0xf8] sm:$0xff]
    %v112 = vld [vmem:[#allocation5] sm:$0x1]
    %v113 = vld [vmem:[#allocation7] sm:$0x1]
    %114 = vadd.xlane.f32.xlu0 %v80
    %v115 = vpop.xlane.xlu0 %114
    %116 = vadd.xlane.f32.xlu0 %v81
    %v117 = vpop.xlane.xlu0 %116
    %118 = vadd.xlane.f32.xlu0 %v82
    %v119 = vpop.xlane.xlu0 %118
    %120 = vadd.xlane.f32.xlu0 %v83
    %v121 = vpop.xlane.xlu0 %120
    %122 = vadd.xlane.f32.xlu0 %v84
    %v123 = vpop.xlane.xlu0 %122
    %124 = vadd.xlane.f32.xlu0 %v85
    %v125 = vpop.xlane.xlu0 %124
    %126 = vadd.xlane.f32.xlu0 %v86
    %v127 = vpop.xlane.xlu0 %126
    %128 = vadd.xlane.f32.xlu0 %v87
    %v129 = vpop.xlane.xlu0 %128
    %130 = vadd.xlane.f32.xlu0 %v88
    %v131 = vpop.xlane.xlu0 %130
    %132 = vadd.xlane.f32.xlu0 %v89
    %v133 = vpop.xlane.xlu0 %132
    %134 = vadd.xlane.f32.xlu0 %v90
    %v135 = vpop.xlane.xlu0 %134
    %136 = vadd.xlane.f32.xlu0 %v91
    %v137 = vpop.xlane.xlu0 %136
    %138 = vadd.xlane.f32.xlu0 %v92
    %v139 = vpop.xlane.xlu0 %138
    %140 = vadd.xlane.f32.xlu0 %v93
    %v141 = vpop.xlane.xlu0 %140
    %142 = vadd.xlane.f32.xlu0 %v94
    %v143 = vpop.xlane.xlu0 %142
    %144 = vadd.xlane.f32.xlu0 %v95
    %v145 = vpop.xlane.xlu0 %144
    %146 = vadd.xlane.f32.xlu0 %v96
    %v147 = vpop.xlane.xlu0 %146
    %148 = vadd.xlane.f32.xlu0 %v97
    %v149 = vpop.xlane.xlu0 %148
    %150 = vadd.xlane.f32.xlu0 %v98
    %v151 = vpop.xlane.xlu0 %150
    %152 = vadd.xlane.f32.xlu0 %v99
    %v153 = vpop.xlane.xlu0 %152
    %154 = vadd.xlane.f32.xlu0 %v100
    %v155 = vpop.xlane.xlu0 %154
    %156 = vadd.xlane.f32.xlu0 %v101
    %v157 = vpop.xlane.xlu0 %156
    %158 = vadd.xlane.f32.xlu0 %v102
    %v159 = vpop.xlane.xlu0 %158
    %160 = vadd.xlane.f32.xlu0 %v103
    %v161 = vpop.xlane.xlu0 %160
    %162 = vadd.xlane.f32.xlu0 %v104
    %v163 = vpop.xlane.xlu0 %162
    %164 = vadd.xlane.f32.xlu0 %v105
    %v165 = vpop.xlane.xlu0 %164
    %166 = vadd.xlane.f32.xlu0 %v106
    %v167 = vpop.xlane.xlu0 %166
    %168 = vadd.xlane.f32.xlu0 %v107
    %v169 = vpop.xlane.xlu0 %168
    %170 = vadd.xlane.f32.xlu0 %v108
    %v171 = vpop.xlane.xlu0 %170
    %172 = vadd.xlane.f32.xlu0 %v109
    %v173 = vpop.xlane.xlu0 %172
    %174 = vadd.xlane.f32.xlu0 %v110
    %v175 = vpop.xlane.xlu0 %174
    %176 = vadd.xlane.f32.xlu0 %v111
    %v177 = vpop.xlane.xlu0 %176
    %v178 = vrcp.pop 128.0
    %v179 = vmul.f32 128.0, %v178
    %v180 = vsub.f32 1.0, %v179
    %v181 = vmul.f32 %v178, %v180
    %v182 = vadd.f32 %v178, %v181
    %vm183 = vweird.f32 %v178
    %v184 = vsel %vm183, %v178, %v182
    %v185 = vmul.f32 %v115, %v184
    %v186 = vmul.f32 %v117, %v184
    %v187 = vmul.f32 %v119, %v184
    %v188 = vmul.f32 %v121, %v184
    %v189 = vmul.f32 %v123, %v184
    %v190 = vmul.f32 %v125, %v184
    %v191 = vmul.f32 %v127, %v184
    %v192 = vmul.f32 %v129, %v184
    %v193 = vmul.f32 %v131, %v184
    %v194 = vmul.f32 %v133, %v184
    %v195 = vmul.f32 %v135, %v184
    %v196 = vmul.f32 %v137, %v184
    %v197 = vmul.f32 %v139, %v184
    %v198 = vmul.f32 %v141, %v184
    %v199 = vmul.f32 %v143, %v184
    %v200 = vmul.f32 %v145, %v184
    %v201 = vmul.f32 %v147, %v184
    %v202 = vmul.f32 %v149, %v184
    %v203 = vmul.f32 %v151, %v184
    %v204 = vmul.f32 %v153, %v184
    %v205 = vmul.f32 %v155, %v184
    %v206 = vmul.f32 %v157, %v184
    %v207 = vmul.f32 %v159, %v184
    %v208 = vmul.f32 %v161, %v184
    %v209 = vmul.f32 %v163, %v184
    %v210 = vmul.f32 %v165, %v184
    %v211 = vmul.f32 %v167, %v184
    %v212 = vmul.f32 %v169, %v184
    %v213 = vmul.f32 %v171, %v184
    %v214 = vmul.f32 %v173, %v184
    %v215 = vmul.f32 %v175, %v184
    %v216 = vmul.f32 %v177, %v184
    %v217 = vsub.f32 %v80, %v185
    %v218 = vsub.f32 %v81, %v186
    %v219 = vsub.f32 %v82, %v187
    %v220 = vsub.f32 %v83, %v188
    %v221 = vsub.f32 %v84, %v189
    %v222 = vsub.f32 %v85, %v190
    %v223 = vsub.f32 %v86, %v191
    %v224 = vsub.f32 %v87, %v192
    %v225 = vsub.f32 %v88, %v193
    %v226 = vsub.f32 %v89, %v194
    %v227 = vsub.f32 %v90, %v195
    %v228 = vsub.f32 %v91, %v196
    %v229 = vsub.f32 %v92, %v197
    %v230 = vsub.f32 %v93, %v198
    %v231 = vsub.f32 %v94, %v199
    %v232 = vsub.f32 %v95, %v200
    %v233 = vsub.f32 %v96, %v201
    %v234 = vsub.f32 %v97, %v202
    %v235 = vsub.f32 %v98, %v203
    %v236 = vsub.f32 %v99, %v204
    %v237 = vsub.f32 %v100, %v205
    %v238 = vsub.f32 %v101, %v206
    %v239 = vsub.f32 %v102, %v207
    %v240 = vsub.f32 %v103, %v208
    %v241 = vsub.f32 %v104, %v209
    %v242 = vsub.f32 %v105, %v210
    %v243 = vsub.f32 %v106, %v211
    %v244 = vsub.f32 %v107, %v212
    %v245 = vsub.f32 %v108, %v213
    %v246 = vsub.f32 %v109, %v214
    %v247 = vsub.f32 %v110, %v215
    %v248 = vsub.f32 %v111, %v216
    %v249 = vmul.f32 %v217, %v217
    %v250 = vmul.f32 %v218, %v218
    %v251 = vmul.f32 %v219, %v219
    %v252 = vmul.f32 %v220, %v220
    %v253 = vmul.f32 %v221, %v221
    %v254 = vmul.f32 %v222, %v222
    %v255 = vmul.f32 %v223, %v223
    %v256 = vmul.f32 %v224, %v224
    %v257 = vmul.f32 %v225, %v225
    %v258 = vmul.f32 %v226, %v226
    %v259 = vmul.f32 %v227, %v227
    %v260 = vmul.f32 %v228, %v228
    %v261 = vmul.f32 %v229, %v229
    %v262 = vmul.f32 %v230, %v230
    %v263 = vmul.f32 %v231, %v231
    %v264 = vmul.f32 %v232, %v232
    %v265 = vmul.f32 %v233, %v233
    %v266 = vmul.f32 %v234, %v234
    %v267 = vmul.f32 %v235, %v235
    %v268 = vmul.f32 %v236, %v236
    %v269 = vmul.f32 %v237, %v237
    %v270 = vmul.f32 %v238, %v238
    %v271 = vmul.f32 %v239, %v239
    %v272 = vmul.f32 %v240, %v240
    %v273 = vmul.f32 %v241, %v241
    %v274 = vmul.f32 %v242, %v242
    %v275 = vmul.f32 %v243, %v243
    %v276 = vmul.f32 %v244, %v244
    %v277 = vmul.f32 %v245, %v245
    %v278 = vmul.f32 %v246, %v246
    %v279 = vmul.f32 %v247, %v247
    %v280 = vmul.f32 %v248, %v248
    %281 = vadd.xlane.f32.xlu0 %v249
    %v282 = vpop.xlane.xlu0 %281
    %283 = vadd.xlane.f32.xlu0 %v250
    %v284 = vpop.xlane.xlu0 %283
    %285 = vadd.xlane.f32.xlu0 %v251
    %v286 = vpop.xlane.xlu0 %285
    %287 = vadd.xlane.f32.xlu0 %v252
    %v288 = vpop.xlane.xlu0 %287
    %289 = vadd.xlane.f32.xlu0 %v253
    %v290 = vpop.xlane.xlu0 %289
    %291 = vadd.xlane.f32.xlu0 %v254
    %v292 = vpop.xlane.xlu0 %291
    %293 = vadd.xlane.f32.xlu0 %v255
    %v294 = vpop.xlane.xlu0 %293
    %295 = vadd.xlane.f32.xlu0 %v256
    %v296 = vpop.xlane.xlu0 %295
    %297 = vadd.xlane.f32.xlu0 %v257
    %v298 = vpop.xlane.xlu0 %297
    %299 = vadd.xlane.f32.xlu0 %v258
    %v300 = vpop.xlane.xlu0 %299
    %301 = vadd.xlane.f32.xlu0 %v259
    %v302 = vpop.xlane.xlu0 %301
    %303 = vadd.xlane.f32.xlu0 %v260
    %v304 = vpop.xlane.xlu0 %303
    %305 = vadd.xlane.f32.xlu0 %v261
    %v306 = vpop.xlane.xlu0 %305
    %307 = vadd.xlane.f32.xlu0 %v262
    %v308 = vpop.xlane.xlu0 %307
    %309 = vadd.xlane.f32.xlu0 %v263
    %v310 = vpop.xlane.xlu0 %309
    %311 = vadd.xlane.f32.xlu0 %v264
    %v312 = vpop.xlane.xlu0 %311
    %313 = vadd.xlane.f32.xlu0 %v265
    %v314 = vpop.xlane.xlu0 %313
    %315 = vadd.xlane.f32.xlu0 %v266
    %v316 = vpop.xlane.xlu0 %315
    %317 = vadd.xlane.f32.xlu0 %v267
    %v318 = vpop.xlane.xlu0 %317
    %319 = vadd.xlane.f32.xlu0 %v268
    %v320 = vpop.xlane.xlu0 %319
    %321 = vadd.xlane.f32.xlu0 %v269
    %v322 = vpop.xlane.xlu0 %321
    %323 = vadd.xlane.f32.xlu0 %v270
    %v324 = vpop.xlane.xlu0 %323
    %325 = vadd.xlane.f32.xlu0 %v271
    %v326 = vpop.xlane.xlu0 %325
    %327 = vadd.xlane.f32.xlu0 %v272
    %v328 = vpop.xlane.xlu0 %327
    %329 = vadd.xlane.f32.xlu0 %v273
    %v330 = vpop.xlane.xlu0 %329
    %331 = vadd.xlane.f32.xlu0 %v274
    %v332 = vpop.xlane.xlu0 %331
    %333 = vadd.xlane.f32.xlu0 %v275
    %v334 = vpop.xlane.xlu0 %333
    %335 = vadd.xlane.f32.xlu0 %v276
    %v336 = vpop.xlane.xlu0 %335
    %337 = vadd.xlane.f32.xlu0 %v277
    %v338 = vpop.xlane.xlu0 %337
    %339 = vadd.xlane.f32.xlu0 %v278
    %v340 = vpop.xlane.xlu0 %339
    %341 = vadd.xlane.f32.xlu0 %v279
    %v342 = vpop.xlane.xlu0 %341
    %343 = vadd.xlane.f32.xlu0 %v280
    %v344 = vpop.xlane.xlu0 %343
    %v345 = vmul.f32 %v282, %v184
    %v346 = vmul.f32 %v284, %v184
    %v347 = vmul.f32 %v286, %v184
    %v348 = vmul.f32 %v288, %v184
    %v349 = vmul.f32 %v290, %v184
    %v350 = vmul.f32 %v292, %v184
    %v351 = vmul.f32 %v294, %v184
    %v352 = vmul.f32 %v296, %v184
    %v353 = vmul.f32 %v298, %v184
    %v354 = vmul.f32 %v300, %v184
    %v355 = vmul.f32 %v302, %v184
    %v356 = vmul.f32 %v304, %v184
    %v357 = vmul.f32 %v306, %v184
    %v358 = vmul.f32 %v308, %v184
    %v359 = vmul.f32 %v310, %v184
    %v360 = vmul.f32 %v312, %v184
    %v361 = vmul.f32 %v314, %v184
    %v362 = vmul.f32 %v316, %v184
    %v363 = vmul.f32 %v318, %v184
    %v364 = vmul.f32 %v320, %v184
    %v365 = vmul.f32 %v322, %v184
    %v366 = vmul.f32 %v324, %v184
    %v367 = vmul.f32 %v326, %v184
    %v368 = vmul.f32 %v328, %v184
    %v369 = vmul.f32 %v330, %v184
    %v370 = vmul.f32 %v332, %v184
    %v371 = vmul.f32 %v334, %v184
    %v372 = vmul.f32 %v336, %v184
    %v373 = vmul.f32 %v338, %v184
    %v374 = vmul.f32 %v340, %v184
    %v375 = vmul.f32 %v342, %v184
    %v376 = vmul.f32 %v344, %v184
    %v377 = vadd.f32 %v345, 1e-05
    %v378 = vadd.f32 %v346, 1e-05
    %v379 = vadd.f32 %v347, 1e-05
    %v380 = vadd.f32 %v348, 1e-05
    %v381 = vadd.f32 %v349, 1e-05
    %v382 = vadd.f32 %v350, 1e-05
    %v383 = vadd.f32 %v351, 1e-05
    %v384 = vadd.f32 %v352, 1e-05
    %v385 = vadd.f32 %v353, 1e-05
    %v386 = vadd.f32 %v354, 1e-05
    %v387 = vadd.f32 %v355, 1e-05
    %v388 = vadd.f32 %v356, 1e-05
    %v389 = vadd.f32 %v357, 1e-05
    %v390 = vadd.f32 %v358, 1e-05
    %v391 = vadd.f32 %v359, 1e-05
    %v392 = vadd.f32 %v360, 1e-05
    %v393 = vadd.f32 %v361, 1e-05
    %v394 = vadd.f32 %v362, 1e-05
    %v395 = vadd.f32 %v363, 1e-05
    %v396 = vadd.f32 %v364, 1e-05
    %v397 = vadd.f32 %v365, 1e-05
    %v398 = vadd.f32 %v366, 1e-05
    %v399 = vadd.f32 %v367, 1e-05
    %v400 = vadd.f32 %v368, 1e-05
    %v401 = vadd.f32 %v369, 1e-05
    %v402 = vadd.f32 %v370, 1e-05
    %v403 = vadd.f32 %v371, 1e-05
    %v404 = vadd.f32 %v372, 1e-05
    %v405 = vadd.f32 %v373, 1e-05
    %v406 = vadd.f32 %v374, 1e-05
    %v407 = vadd.f32 %v375, 1e-05
    %v408 = vadd.f32 %v376, 1e-05
    %v409 = vrsqrt.pop %v377
    %v410 = vmul.f32 %v409, %v377
    %v411 = vmul.f32 %v410, %v409
    %v412 = vmul.f32 0.5, %v411
    %v413 = vsub.f32 1.5, %v412
    %v414 = vmul.f32 %v409, %v413
    %vm415 = vweird.f32 %v377
    %vm416 = vweird.f32 %v409
    %vm417 = vmor %vm415, %vm416
    %v418 = vsel %vm417, %v409, %v414
    %v419 = vrsqrt.pop %v378
    %v420 = vmul.f32 %v419, %v378
    %v421 = vmul.f32 %v420, %v419
    %v422 = vmul.f32 0.5, %v421
    %v423 = vsub.f32 1.5, %v422
    %v424 = vmul.f32 %v419, %v423
    %vm425 = vweird.f32 %v378
    %vm426 = vweird.f32 %v419
    %vm427 = vmor %vm425, %vm426
    %v428 = vsel %vm427, %v419, %v424
    %v429 = vrsqrt.pop %v379
    %v430 = vmul.f32 %v429, %v379
    %v431 = vmul.f32 %v430, %v429
    %v432 = vmul.f32 0.5, %v431
    %v433 = vsub.f32 1.5, %v432
    %v434 = vmul.f32 %v429, %v433
    %vm435 = vweird.f32 %v379
    %vm436 = vweird.f32 %v429
    %vm437 = vmor %vm435, %vm436
    %v438 = vsel %vm437, %v429, %v434
    %v439 = vrsqrt.pop %v380
    %v440 = vmul.f32 %v439, %v380
    %v441 = vmul.f32 %v440, %v439
    %v442 = vmul.f32 0.5, %v441
    %v443 = vsub.f32 1.5, %v442
    %v444 = vmul.f32 %v439, %v443
    %vm445 = vweird.f32 %v380
    %vm446 = vweird.f32 %v439
    %vm447 = vmor %vm445, %vm446
    %v448 = vsel %vm447, %v439, %v444
    %v449 = vrsqrt.pop %v381
    %v450 = vmul.f32 %v449, %v381
    %v451 = vmul.f32 %v450, %v449
    %v452 = vmul.f32 0.5, %v451
    %v453 = vsub.f32 1.5, %v452
    %v454 = vmul.f32 %v449, %v453
    %vm455 = vweird.f32 %v381
    %vm456 = vweird.f32 %v449
    %vm457 = vmor %vm455, %vm456
    %v458 = vsel %vm457, %v449, %v454
    %v459 = vrsqrt.pop %v382
    %v460 = vmul.f32 %v459, %v382
    %v461 = vmul.f32 %v460, %v459
    %v462 = vmul.f32 0.5, %v461
    %v463 = vsub.f32 1.5, %v462
    %v464 = vmul.f32 %v459, %v463
    %vm465 = vweird.f32 %v382
    %vm466 = vweird.f32 %v459
    %vm467 = vmor %vm465, %vm466
    %v468 = vsel %vm467, %v459, %v464
    %v469 = vrsqrt.pop %v383
    %v470 = vmul.f32 %v469, %v383
    %v471 = vmul.f32 %v470, %v469
    %v472 = vmul.f32 0.5, %v471
    %v473 = vsub.f32 1.5, %v472
    %v474 = vmul.f32 %v469, %v473
    %vm475 = vweird.f32 %v383
    %vm476 = vweird.f32 %v469
    %vm477 = vmor %vm475, %vm476
    %v478 = vsel %vm477, %v469, %v474
    %v479 = vrsqrt.pop %v384
    %v480 = vmul.f32 %v479, %v384
    %v481 = vmul.f32 %v480, %v479
    %v482 = vmul.f32 0.5, %v481
    %v483 = vsub.f32 1.5, %v482
    %v484 = vmul.f32 %v479, %v483
    %vm485 = vweird.f32 %v384
    %vm486 = vweird.f32 %v479
    %vm487 = vmor %vm485, %vm486
    %v488 = vsel %vm487, %v479, %v484
    %v489 = vrsqrt.pop %v385
    %v490 = vmul.f32 %v489, %v385
    %v491 = vmul.f32 %v490, %v489
    %v492 = vmul.f32 0.5, %v491
    %v493 = vsub.f32 1.5, %v492
    %v494 = vmul.f32 %v489, %v493
    %vm495 = vweird.f32 %v385
    %vm496 = vweird.f32 %v489
    %vm497 = vmor %vm495, %vm496
    %v498 = vsel %vm497, %v489, %v494
    %v499 = vrsqrt.pop %v386
    %v500 = vmul.f32 %v499, %v386
    %v501 = vmul.f32 %v500, %v499
    %v502 = vmul.f32 0.5, %v501
    %v503 = vsub.f32 1.5, %v502
    %v504 = vmul.f32 %v499, %v503
    %vm505 = vweird.f32 %v386
    %vm506 = vweird.f32 %v499
    %vm507 = vmor %vm505, %vm506
    %v508 = vsel %vm507, %v499, %v504
    %v509 = vrsqrt.pop %v387
    %v510 = vmul.f32 %v509, %v387
    %v511 = vmul.f32 %v510, %v509
    %v512 = vmul.f32 0.5, %v511
    %v513 = vsub.f32 1.5, %v512
    %v514 = vmul.f32 %v509, %v513
    %vm515 = vweird.f32 %v387
    %vm516 = vweird.f32 %v509
    %vm517 = vmor %vm515, %vm516
    %v518 = vsel %vm517, %v509, %v514
    %v519 = vrsqrt.pop %v388
    %v520 = vmul.f32 %v519, %v388
    %v521 = vmul.f32 %v520, %v519
    %v522 = vmul.f32 0.5, %v521
    %v523 = vsub.f32 1.5, %v522
    %v524 = vmul.f32 %v519, %v523
    %vm525 = vweird.f32 %v388
    %vm526 = vweird.f32 %v519
    %vm527 = vmor %vm525, %vm526
    %v528 = vsel %vm527, %v519, %v524
    %v529 = vrsqrt.pop %v389
    %v530 = vmul.f32 %v529, %v389
    %v531 = vmul.f32 %v530, %v529
    %v532 = vmul.f32 0.5, %v531
    %v533 = vsub.f32 1.5, %v532
    %v534 = vmul.f32 %v529, %v533
    %vm535 = vweird.f32 %v389
    %vm536 = vweird.f32 %v529
    %vm537 = vmor %vm535, %vm536
    %v538 = vsel %vm537, %v529, %v534
    %v539 = vrsqrt.pop %v390
    %v540 = vmul.f32 %v539, %v390
    %v541 = vmul.f32 %v540, %v539
    %v542 = vmul.f32 0.5, %v541
    %v543 = vsub.f32 1.5, %v542
    %v544 = vmul.f32 %v539, %v543
    %vm545 = vweird.f32 %v390
    %vm546 = vweird.f32 %v539
    %vm547 = vmor %vm545, %vm546
    %v548 = vsel %vm547, %v539, %v544
    %v549 = vrsqrt.pop %v391
    %v550 = vmul.f32 %v549, %v391
    %v551 = vmul.f32 %v550, %v549
    %v552 = vmul.f32 0.5, %v551
    %v553 = vsub.f32 1.5, %v552
    %v554 = vmul.f32 %v549, %v553
    %vm555 = vweird.f32 %v391
    %vm556 = vweird.f32 %v549
    %vm557 = vmor %vm555, %vm556
    %v558 = vsel %vm557, %v549, %v554
    %v559 = vrsqrt.pop %v392
    %v560 = vmul.f32 %v559, %v392
    %v561 = vmul.f32 %v560, %v559
    %v562 = vmul.f32 0.5, %v561
    %v563 = vsub.f32 1.5, %v562
    %v564 = vmul.f32 %v559, %v563
    %vm565 = vweird.f32 %v392
    %vm566 = vweird.f32 %v559
    %vm567 = vmor %vm565, %vm566
    %v568 = vsel %vm567, %v559, %v564
    %v569 = vrsqrt.pop %v393
    %v570 = vmul.f32 %v569, %v393
    %v571 = vmul.f32 %v570, %v569
    %v572 = vmul.f32 0.5, %v571
    %v573 = vsub.f32 1.5, %v572
    %v574 = vmul.f32 %v569, %v573
    %vm575 = vweird.f32 %v393
    %vm576 = vweird.f32 %v569
    %vm577 = vmor %vm575, %vm576
    %v578 = vsel %vm577, %v569, %v574
    %v579 = vrsqrt.pop %v394
    %v580 = vmul.f32 %v579, %v394
    %v581 = vmul.f32 %v580, %v579
    %v582 = vmul.f32 0.5, %v581
    %v583 = vsub.f32 1.5, %v582
    %v584 = vmul.f32 %v579, %v583
    %vm585 = vweird.f32 %v394
    %vm586 = vweird.f32 %v579
    %vm587 = vmor %vm585, %vm586
    %v588 = vsel %vm587, %v579, %v584
    %v589 = vrsqrt.pop %v395
    %v590 = vmul.f32 %v589, %v395
    %v591 = vmul.f32 %v590, %v589
    %v592 = vmul.f32 0.5, %v591
    %v593 = vsub.f32 1.5, %v592
    %v594 = vmul.f32 %v589, %v593
    %vm595 = vweird.f32 %v395
    %vm596 = vweird.f32 %v589
    %vm597 = vmor %vm595, %vm596
    %v598 = vsel %vm597, %v589, %v594
    %v599 = vrsqrt.pop %v396
    %v600 = vmul.f32 %v599, %v396
    %v601 = vmul.f32 %v600, %v599
    %v602 = vmul.f32 0.5, %v601
    %v603 = vsub.f32 1.5, %v602
    %v604 = vmul.f32 %v599, %v603
    %vm605 = vweird.f32 %v396
    %vm606 = vweird.f32 %v599
    %vm607 = vmor %vm605, %vm606
    %v608 = vsel %vm607, %v599, %v604
    %v609 = vrsqrt.pop %v397
    %v610 = vmul.f32 %v609, %v397
    %v611 = vmul.f32 %v610, %v609
    %v612 = vmul.f32 0.5, %v611
    %v613 = vsub.f32 1.5, %v612
    %v614 = vmul.f32 %v609, %v613
    %vm615 = vweird.f32 %v397
    %vm616 = vweird.f32 %v609
    %vm617 = vmor %vm615, %vm616
    %v618 = vsel %vm617, %v609, %v614
    %v619 = vrsqrt.pop %v398
    %v620 = vmul.f32 %v619, %v398
    %v621 = vmul.f32 %v620, %v619
    %v622 = vmul.f32 0.5, %v621
    %v623 = vsub.f32 1.5, %v622
    %v624 = vmul.f32 %v619, %v623
    %vm625 = vweird.f32 %v398
    %vm626 = vweird.f32 %v619
    %vm627 = vmor %vm625, %vm626
    %v628 = vsel %vm627, %v619, %v624
    %v629 = vrsqrt.pop %v399
    %v630 = vmul.f32 %v629, %v399
    %v631 = vmul.f32 %v630, %v629
    %v632 = vmul.f32 0.5, %v631
    %v633 = vsub.f32 1.5, %v632
    %v634 = vmul.f32 %v629, %v633
    %vm635 = vweird.f32 %v399
    %vm636 = vweird.f32 %v629
    %vm637 = vmor %vm635, %vm636
    %v638 = vsel %vm637, %v629, %v634
    %v639 = vrsqrt.pop %v400
    %v640 = vmul.f32 %v639, %v400
    %v641 = vmul.f32 %v640, %v639
    %v642 = vmul.f32 0.5, %v641
    %v643 = vsub.f32 1.5, %v642
    %v644 = vmul.f32 %v639, %v643
    %vm645 = vweird.f32 %v400
    %vm646 = vweird.f32 %v639
    %vm647 = vmor %vm645, %vm646
    %v648 = vsel %vm647, %v639, %v644
    %v649 = vrsqrt.pop %v401
    %v650 = vmul.f32 %v649, %v401
    %v651 = vmul.f32 %v650, %v649
    %v652 = vmul.f32 0.5, %v651
    %v653 = vsub.f32 1.5, %v652
    %v654 = vmul.f32 %v649, %v653
    %vm655 = vweird.f32 %v401
    %vm656 = vweird.f32 %v649
    %vm657 = vmor %vm655, %vm656
    %v658 = vsel %vm657, %v649, %v654
    %v659 = vrsqrt.pop %v402
    %v660 = vmul.f32 %v659, %v402
    %v661 = vmul.f32 %v660, %v659
    %v662 = vmul.f32 0.5, %v661
    %v663 = vsub.f32 1.5, %v662
    %v664 = vmul.f32 %v659, %v663
    %vm665 = vweird.f32 %v402
    %vm666 = vweird.f32 %v659
    %vm667 = vmor %vm665, %vm666
    %v668 = vsel %vm667, %v659, %v664
    %v669 = vrsqrt.pop %v403
    %v670 = vmul.f32 %v669, %v403
    %v671 = vmul.f32 %v670, %v669
    %v672 = vmul.f32 0.5, %v671
    %v673 = vsub.f32 1.5, %v672
    %v674 = vmul.f32 %v669, %v673
    %vm675 = vweird.f32 %v403
    %vm676 = vweird.f32 %v669
    %vm677 = vmor %vm675, %vm676
    %v678 = vsel %vm677, %v669, %v674
    %v679 = vrsqrt.pop %v404
    %v680 = vmul.f32 %v679, %v404
    %v681 = vmul.f32 %v680, %v679
    %v682 = vmul.f32 0.5, %v681
    %v683 = vsub.f32 1.5, %v682
    %v684 = vmul.f32 %v679, %v683
    %vm685 = vweird.f32 %v404
    %vm686 = vweird.f32 %v679
    %vm687 = vmor %vm685, %vm686
    %v688 = vsel %vm687, %v679, %v684
    %v689 = vrsqrt.pop %v405
    %v690 = vmul.f32 %v689, %v405
    %v691 = vmul.f32 %v690, %v689
    %v692 = vmul.f32 0.5, %v691
    %v693 = vsub.f32 1.5, %v692
    %v694 = vmul.f32 %v689, %v693
    %vm695 = vweird.f32 %v405
    %vm696 = vweird.f32 %v689
    %vm697 = vmor %vm695, %vm696
    %v698 = vsel %vm697, %v689, %v694
    %v699 = vrsqrt.pop %v406
    %v700 = vmul.f32 %v699, %v406
    %v701 = vmul.f32 %v700, %v699
    %v702 = vmul.f32 0.5, %v701
    %v703 = vsub.f32 1.5, %v702
    %v704 = vmul.f32 %v699, %v703
    %vm705 = vweird.f32 %v406
    %vm706 = vweird.f32 %v699
    %vm707 = vmor %vm705, %vm706
    %v708 = vsel %vm707, %v699, %v704
    %v709 = vrsqrt.pop %v407
    %v710 = vmul.f32 %v709, %v407
    %v711 = vmul.f32 %v710, %v709
    %v712 = vmul.f32 0.5, %v711
    %v713 = vsub.f32 1.5, %v712
    %v714 = vmul.f32 %v709, %v713
    %vm715 = vweird.f32 %v407
    %vm716 = vweird.f32 %v709
    %vm717 = vmor %vm715, %vm716
    %v718 = vsel %vm717, %v709, %v714
    %v719 = vrsqrt.pop %v408
    %v720 = vmul.f32 %v719, %v408
    %v721 = vmul.f32 %v720, %v719
    %v722 = vmul.f32 0.5, %v721
    %v723 = vsub.f32 1.5, %v722
    %v724 = vmul.f32 %v719, %v723
    %vm725 = vweird.f32 %v408
    %vm726 = vweird.f32 %v719
    %vm727 = vmor %vm725, %vm726
    %v728 = vsel %vm727, %v719, %v724
    %v729 = vmul.f32 %v217, %v418
    %v730 = vmul.f32 %v218, %v428
    %v731 = vmul.f32 %v219, %v438
    %v732 = vmul.f32 %v220, %v448
    %v733 = vmul.f32 %v221, %v458
    %v734 = vmul.f32 %v222, %v468
    %v735 = vmul.f32 %v223, %v478
    %v736 = vmul.f32 %v224, %v488
    %v737 = vmul.f32 %v225, %v498
    %v738 = vmul.f32 %v226, %v508
    %v739 = vmul.f32 %v227, %v518
    %v740 = vmul.f32 %v228, %v528
    %v741 = vmul.f32 %v229, %v538
    %v742 = vmul.f32 %v230, %v548
    %v743 = vmul.f32 %v231, %v558
    %v744 = vmul.f32 %v232, %v568
    %v745 = vmul.f32 %v233, %v578
    %v746 = vmul.f32 %v234, %v588
    %v747 = vmul.f32 %v235, %v598
    %v748 = vmul.f32 %v236, %v608
    %v749 = vmul.f32 %v237, %v618
    %v750 = vmul.f32 %v238, %v628
    %v751 = vmul.f32 %v239, %v638
    %v752 = vmul.f32 %v240, %v648
    %v753 = vmul.f32 %v241, %v658
    %v754 = vmul.f32 %v242, %v668
    %v755 = vmul.f32 %v243, %v678
    %v756 = vmul.f32 %v244, %v688
    %v757 = vmul.f32 %v245, %v698
    %v758 = vmul.f32 %v246, %v708
    %v759 = vmul.f32 %v247, %v718
    %v760 = vmul.f32 %v248, %v728
    %v762 = vperm.slane %v112, 0
    %v764 = vmul.f32 %v729, %v762
    %v765 = vmul.f32 %v730, %v762
    %v766 = vmul.f32 %v731, %v762
    %v767 = vmul.f32 %v732, %v762
    %v768 = vmul.f32 %v733, %v762
    %v769 = vmul.f32 %v734, %v762
    %v770 = vmul.f32 %v735, %v762
    %v771 = vmul.f32 %v736, %v762
    %v772 = vmul.f32 %v737, %v762
    %v773 = vmul.f32 %v738, %v762
    %v774 = vmul.f32 %v739, %v762
    %v775 = vmul.f32 %v740, %v762
    %v776 = vmul.f32 %v741, %v762
    %v777 = vmul.f32 %v742, %v762
    %v778 = vmul.f32 %v743, %v762
    %v779 = vmul.f32 %v744, %v762
    %v780 = vmul.f32 %v745, %v762
    %v781 = vmul.f32 %v746, %v762
    %v782 = vmul.f32 %v747, %v762
    %v783 = vmul.f32 %v748, %v762
    %v784 = vmul.f32 %v749, %v762
    %v785 = vmul.f32 %v750, %v762
    %v786 = vmul.f32 %v751, %v762
    %v787 = vmul.f32 %v752, %v762
    %v788 = vmul.f32 %v753, %v762
    %v789 = vmul.f32 %v754, %v762
    %v790 = vmul.f32 %v755, %v762
    %v791 = vmul.f32 %v756, %v762
    %v792 = vmul.f32 %v757, %v762
    %v793 = vmul.f32 %v758, %v762
    %v794 = vmul.f32 %v759, %v762
    %v795 = vmul.f32 %v760, %v762
    %v797 = vperm.slane %v113, 0
    %v799 = vadd.f32 %v764, %v797
    %v800 = vadd.f32 %v765, %v797
    %v801 = vadd.f32 %v766, %v797
    %v802 = vadd.f32 %v767, %v797
    %v803 = vadd.f32 %v768, %v797
    %v804 = vadd.f32 %v769, %v797
    %v805 = vadd.f32 %v770, %v797
    %v806 = vadd.f32 %v771, %v797
    %v807 = vadd.f32 %v772, %v797
    %v808 = vadd.f32 %v773, %v797
    %v809 = vadd.f32 %v774, %v797
    %v810 = vadd.f32 %v775, %v797
    %v811 = vadd.f32 %v776, %v797
    %v812 = vadd.f32 %v777, %v797
    %v813 = vadd.f32 %v778, %v797
    %v814 = vadd.f32 %v779, %v797
    %v815 = vadd.f32 %v780, %v797
    %v816 = vadd.f32 %v781, %v797
    %v817 = vadd.f32 %v782, %v797
    %v818 = vadd.f32 %v783, %v797
    %v819 = vadd.f32 %v784, %v797
    %v820 = vadd.f32 %v785, %v797
    %v821 = vadd.f32 %v786, %v797
    %v822 = vadd.f32 %v787, %v797
    %v823 = vadd.f32 %v788, %v797
    %v824 = vadd.f32 %v789, %v797
    %v825 = vadd.f32 %v790, %v797
    %v826 = vadd.f32 %v791, %v797
    %v827 = vadd.f32 %v792, %v797
    %v828 = vadd.f32 %v793, %v797
    %v829 = vadd.f32 %v794, %v797
    %v830 = vadd.f32 %v795, %v797
    %v831 = vpack.c.bf16 %v800, %v799
    %v832 = vpack.c.bf16 %v802, %v801
    %v833 = vpack.c.bf16 %v804, %v803
    %v834 = vpack.c.bf16 %v806, %v805
    %v835 = vpack.c.bf16 %v808, %v807
    %v836 = vpack.c.bf16 %v810, %v809
    %v837 = vpack.c.bf16 %v812, %v811
    %v838 = vpack.c.bf16 %v814, %v813
    %v839 = vpack.c.bf16 %v816, %v815
    %v840 = vpack.c.bf16 %v818, %v817
    %v841 = vpack.c.bf16 %v820, %v819
    %v842 = vpack.c.bf16 %v822, %v821
    %v843 = vpack.c.bf16 %v824, %v823
    %v844 = vpack.c.bf16 %v826, %v825
    %v845 = vpack.c.bf16 %v828, %v827
    %v846 = vpack.c.bf16 %v830, %v829
    %v847 = vld [vmem:[#allocation8] sm:$0xff]
    %v848 = vld [vmem:[#allocation8 + $0x8] sm:$0xf]
    %v849 = vld [vmem:[#allocation8 + $0xc] sm:$0xff]
    %v850 = vld [vmem:[#allocation8 + $0x14] sm:$0xf]
    %v851 = vld [vmem:[#allocation8 + $0x18] sm:$0xff]
    %v852 = vld [vmem:[#allocation8 + $0x20] sm:$0xf]
    %v853 = vld [vmem:[#allocation8 + $0x24] sm:$0xff]
    %v854 = vld [vmem:[#allocation8 + $0x2c] sm:$0xf]
    %v855 = vld [vmem:[#allocation8 + $0x30] sm:$0xff]
    %v856 = vld [vmem:[#allocation8 + $0x38] sm:$0xf]
    %v857 = vld [vmem:[#allocation8 + $0x3c] sm:$0xff]
    %v858 = vld [vmem:[#allocation8 + $0x44] sm:$0xf]
    %v859 = vld [vmem:[#allocation8 + $0x48] sm:$0xff]
    %v860 = vld [vmem:[#allocation8 + $0x50] sm:$0xf]
    %v861 = vld [vmem:[#allocation8 + $0x54] sm:$0xff]
    %v862 = vld [vmem:[#allocation8 + $0x5c] sm:$0xf]
    %v863 = vld [vmem:[#allocation8 + $0x60] sm:$0xff]
    %v864 = vld [vmem:[#allocation8 + $0x68] sm:$0xf]
    %v865 = vld [vmem:[#allocation8 + $0x6c] sm:$0xff]
    %v866 = vld [vmem:[#allocation8 + $0x74] sm:$0xf]
    %v867 = vld [vmem:[#allocation8 + $0x78] sm:$0xff]
    %v868 = vld [vmem:[#allocation8 + $0x80] sm:$0xf]
    %v869 = vld [vmem:[#allocation8 + $0x84] sm:$0xff]
    %v870 = vld [vmem:[#allocation8 + $0x8c] sm:$0xf]
    %v871 = vld [vmem:[#allocation8 + $0x90] sm:$0xff]
    %v872 = vld [vmem:[#allocation8 + $0x98] sm:$0xf]
    %v873 = vld [vmem:[#allocation8 + $0x9c] sm:$0xff]
    %v874 = vld [vmem:[#allocation8 + $0xa4] sm:$0xf]
    %v875 = vld [vmem:[#allocation8 + $0xa8] sm:$0xff]
    %v876 = vld [vmem:[#allocation8 + $0xb0] sm:$0xf]
    %v877 = vld [vmem:[#allocation8 + $0xb4] sm:$0xff]
    %v878 = vld [vmem:[#allocation8 + $0xbc] sm:$0xf]
    %v879 = vld [vmem:[%s4] sm:$0x7]
    %v881 = vperm.slane %v879, 0
    %v882 = vperm.slane %v879, 1
    %v883 = vperm.slane %v879, 2
    %v919 = vunpack.c.l.b16 %v847
    %v920 = vunpack.c.h.b16 %v847
    %v921 = vunpack.c.l.b16 %v848
    %v922 = vunpack.c.l.b16 %v849
    %v923 = vunpack.c.h.b16 %v849
    %v924 = vunpack.c.l.b16 %v850
    %v925 = vunpack.c.l.b16 %v851
    %v926 = vunpack.c.h.b16 %v851
    %v927 = vunpack.c.l.b16 %v852
    %v928 = vunpack.c.l.b16 %v853
    %v929 = vunpack.c.h.b16 %v853
    %v930 = vunpack.c.l.b16 %v854
    %v931 = vunpack.c.l.b16 %v855
    %v932 = vunpack.c.h.b16 %v855
    %v933 = vunpack.c.l.b16 %v856
    %v934 = vunpack.c.l.b16 %v857
    %v935 = vunpack.c.h.b16 %v857
    %v936 = vunpack.c.l.b16 %v858
    %v937 = vunpack.c.l.b16 %v859
    %v938 = vunpack.c.h.b16 %v859
    %v939 = vunpack.c.l.b16 %v860
    %v940 = vunpack.c.l.b16 %v861
    %v941 = vunpack.c.h.b16 %v861
    %v942 = vunpack.c.l.b16 %v862
    %v943 = vunpack.c.l.b16 %v863
    %v944 = vunpack.c.h.b16 %v863
    %v945 = vunpack.c.l.b16 %v864
    %v946 = vunpack.c.l.b16 %v865
    %v947 = vunpack.c.h.b16 %v865
    %v948 = vunpack.c.l.b16 %v866
    %v949 = vunpack.c.l.b16 %v867
    %v950 = vunpack.c.h.b16 %v867
    %v951 = vunpack.c.l.b16 %v868
    %v952 = vunpack.c.l.b16 %v869
    %v953 = vunpack.c.h.b16 %v869
    %v954 = vunpack.c.l.b16 %v870
    %v955 = vunpack.c.l.b16 %v871
    %v956 = vunpack.c.h.b16 %v871
    %v957 = vunpack.c.l.b16 %v872
    %v958 = vunpack.c.l.b16 %v873
    %v959 = vunpack.c.h.b16 %v873
    %v960 = vunpack.c.l.b16 %v874
    %v961 = vunpack.c.l.b16 %v875
    %v962 = vunpack.c.h.b16 %v875
    %v963 = vunpack.c.l.b16 %v876
    %v964 = vunpack.c.l.b16 %v877
    %v965 = vunpack.c.h.b16 %v877
    %v966 = vunpack.c.l.b16 %v878
    %v967 = vpack.c.b16 %v922, %v919
    %v968 = vpack.c.b16 %v923, %v920
    %v969 = vpack.c.b16 %v924, %v921
    %v970 = vpack.c.b16 %v928, %v925
    %v971 = vpack.c.b16 %v929, %v926
    %v972 = vpack.c.b16 %v930, %v927
    %v973 = vpack.c.b16 %v934, %v931
    %v974 = vpack.c.b16 %v935, %v932
    %v975 = vpack.c.b16 %v936, %v933
    %v976 = vpack.c.b16 %v940, %v937
    %v977 = vpack.c.b16 %v941, %v938
    %v978 = vpack.c.b16 %v942, %v939
    %v979 = vpack.c.b16 %v946, %v943
    %v980 = vpack.c.b16 %v947, %v944
    %v981 = vpack.c.b16 %v948, %v945
    %v982 = vpack.c.b16 %v952, %v949
    %v983 = vpack.c.b16 %v953, %v950
    %v984 = vpack.c.b16 %v954, %v951
    %v985 = vpack.c.b16 %v958, %v955
    %v986 = vpack.c.b16 %v959, %v956
    %v987 = vpack.c.b16 %v960, %v957
    %v988 = vpack.c.b16 %v964, %v961
    %v989 = vpack.c.b16 %v965, %v962
    %v990 = vpack.c.b16 %v966, %v963
    %1015 = vmatpush.bf16.msra.mxu0 %v988
    %1016 = vmatpush.bf16.msra.mxu0 %v985
    %1017 = vmatpush.bf16.msra.mxu0 %v982
    %1018 = vmatpush.bf16.msra.mxu0 %v979
    %1019 = vmatpush.bf16.msra.mxu0 %v976
    %1020 = vmatpush.bf16.msra.mxu0 %v973
    %1021 = vmatpush.bf16.msra.mxu0 %v970
    %1022 = vmatpush.bf16.msra.mxu0 %v967
    %1023 = vmatmul.bf16.gmra.mxu0 %v831
    %v1024 = vpop.f32.mrf.mxu0
    %v1025 = vadd.f32 %v881, %v1024
    %v1026 = vpop.f32.mrf.mxu0
    %v1027 = vadd.f32 %v881, %v1026
    %1028 = vmatmul.bf16.gmra.mxu0 %v832
    %v1029 = vpop.f32.mrf.mxu0
    %v1030 = vadd.f32 %v881, %v1029
    %v1031 = vpop.f32.mrf.mxu0
    %v1032 = vadd.f32 %v881, %v1031
    %1033 = vmatmul.bf16.gmra.mxu0 %v833
    %v1034 = vpop.f32.mrf.mxu0
    %v1035 = vadd.f32 %v881, %v1034
    %v1036 = vpop.f32.mrf.mxu0
    %v1037 = vadd.f32 %v881, %v1036
    %1038 = vmatmul.bf16.gmra.mxu0 %v834
    %v1039 = vpop.f32.mrf.mxu0
    %v1040 = vadd.f32 %v881, %v1039
    %v1041 = vpop.f32.mrf.mxu0
    %v1042 = vadd.f32 %v881, %v1041
    %1043 = vmatmul.bf16.gmra.mxu0 %v835
    %v1044 = vpop.f32.mrf.mxu0
    %v1045 = vadd.f32 %v881, %v1044
    %v1046 = vpop.f32.mrf.mxu0
    %v1047 = vadd.f32 %v881, %v1046
    %1048 = vmatmul.bf16.gmra.mxu0 %v836
    %v1049 = vpop.f32.mrf.mxu0
    %v1050 = vadd.f32 %v881, %v1049
    %v1051 = vpop.f32.mrf.mxu0
    %v1052 = vadd.f32 %v881, %v1051
    %1053 = vmatmul.bf16.gmra.mxu0 %v837
    %v1054 = vpop.f32.mrf.mxu0
    %v1055 = vadd.f32 %v881, %v1054
    %v1056 = vpop.f32.mrf.mxu0
    %v1057 = vadd.f32 %v881, %v1056
    %1058 = vmatmul.bf16.gmra.mxu0 %v838
    %v1059 = vpop.f32.mrf.mxu0
    %v1060 = vadd.f32 %v881, %v1059
    %v1061 = vpop.f32.mrf.mxu0
    %v1062 = vadd.f32 %v881, %v1061
    %1063 = vmatmul.bf16.gmra.mxu0 %v839
    %v1064 = vpop.f32.mrf.mxu0
    %v1065 = vadd.f32 %v881, %v1064
    %v1066 = vpop.f32.mrf.mxu0
    %v1067 = vadd.f32 %v881, %v1066
    %1068 = vmatmul.bf16.gmra.mxu0 %v840
    %v1069 = vpop.f32.mrf.mxu0
    %v1070 = vadd.f32 %v881, %v1069
    %v1071 = vpop.f32.mrf.mxu0
    %v1072 = vadd.f32 %v881, %v1071
    %1073 = vmatmul.bf16.gmra.mxu0 %v841
    %v1074 = vpop.f32.mrf.mxu0
    %v1075 = vadd.f32 %v881, %v1074
    %v1076 = vpop.f32.mrf.mxu0
    %v1077 = vadd.f32 %v881, %v1076
    %1078 = vmatmul.bf16.gmra.mxu0 %v842
    %v1079 = vpop.f32.mrf.mxu0
    %v1080 = vadd.f32 %v881, %v1079
    %v1081 = vpop.f32.mrf.mxu0
    %v1082 = vadd.f32 %v881, %v1081
    %1083 = vmatmul.bf16.gmra.mxu0 %v843
    %v1084 = vpop.f32.mrf.mxu0
    %v1085 = vadd.f32 %v881, %v1084
    %v1086 = vpop.f32.mrf.mxu0
    %v1087 = vadd.f32 %v881, %v1086
    %1088 = vmatmul.bf16.gmra.mxu0 %v844
    %v1089 = vpop.f32.mrf.mxu0
    %v1090 = vadd.f32 %v881, %v1089
    %v1091 = vpop.f32.mrf.mxu0
    %v1092 = vadd.f32 %v881, %v1091
    %1093 = vmatmul.bf16.gmra.mxu0 %v845
    %v1094 = vpop.f32.mrf.mxu0
    %v1095 = vadd.f32 %v881, %v1094
    %v1096 = vpop.f32.mrf.mxu0
    %v1097 = vadd.f32 %v881, %v1096
    %1098 = vmatmul.bf16.gmra.mxu0 %v846
    %v1099 = vpop.f32.mrf.mxu0
    %v1100 = vadd.f32 %v881, %v1099
    %v1101 = vpop.f32.mrf.mxu0
    %v1102 = vadd.f32 %v881, %v1101
    %1103 = vdwg.mxu0
    %1104 = vmatpush.bf16.msra.mxu0 %v989
    %1105 = vmatpush.bf16.msra.mxu0 %v986
    %1106 = vmatpush.bf16.msra.mxu0 %v983
    %1107 = vmatpush.bf16.msra.mxu0 %v980
    %1108 = vmatpush.bf16.msra.mxu0 %v977
    %1109 = vmatpush.bf16.msra.mxu0 %v974
    %1110 = vmatpush.bf16.msra.mxu0 %v971
    %1111 = vmatpush.bf16.msra.mxu0 %v968
    %1112 = vmatmul.bf16.gmra.mxu0 %v831
    %v1113 = vpop.f32.mrf.mxu0
    %v1114 = vadd.f32 %v882, %v1113
    %v1115 = vpop.f32.mrf.mxu0
    %v1116 = vadd.f32 %v882, %v1115
    %1117 = vmatmul.bf16.gmra.mxu0 %v832
    %v1118 = vpop.f32.mrf.mxu0
    %v1119 = vadd.f32 %v882, %v1118
    %v1120 = vpop.f32.mrf.mxu0
    %v1121 = vadd.f32 %v882, %v1120
    %1122 = vmatmul.bf16.gmra.mxu0 %v833
    %v1123 = vpop.f32.mrf.mxu0
    %v1124 = vadd.f32 %v882, %v1123
    %v1125 = vpop.f32.mrf.mxu0
    %v1126 = vadd.f32 %v882, %v1125
    %1127 = vmatmul.bf16.gmra.mxu0 %v834
    %v1128 = vpop.f32.mrf.mxu0
    %v1129 = vadd.f32 %v882, %v1128
    %v1130 = vpop.f32.mrf.mxu0
    %v1131 = vadd.f32 %v882, %v1130
    %1132 = vmatmul.bf16.gmra.mxu0 %v835
    %v1133 = vpop.f32.mrf.mxu0
    %v1134 = vadd.f32 %v882, %v1133
    %v1135 = vpop.f32.mrf.mxu0
    %v1136 = vadd.f32 %v882, %v1135
    %1137 = vmatmul.bf16.gmra.mxu0 %v836
    %v1138 = vpop.f32.mrf.mxu0
    %v1139 = vadd.f32 %v882, %v1138
    %v1140 = vpop.f32.mrf.mxu0
    %v1141 = vadd.f32 %v882, %v1140
    %1142 = vmatmul.bf16.gmra.mxu0 %v837
    %v1143 = vpop.f32.mrf.mxu0
    %v1144 = vadd.f32 %v882, %v1143
    %v1145 = vpop.f32.mrf.mxu0
    %v1146 = vadd.f32 %v882, %v1145
    %1147 = vmatmul.bf16.gmra.mxu0 %v838
    %v1148 = vpop.f32.mrf.mxu0
    %v1149 = vadd.f32 %v882, %v1148
    %v1150 = vpop.f32.mrf.mxu0
    %v1151 = vadd.f32 %v882, %v1150
    %1152 = vmatmul.bf16.gmra.mxu0 %v839
    %v1153 = vpop.f32.mrf.mxu0
    %v1154 = vadd.f32 %v882, %v1153
    %v1155 = vpop.f32.mrf.mxu0
    %v1156 = vadd.f32 %v882, %v1155
    %1157 = vmatmul.bf16.gmra.mxu0 %v840
    %v1158 = vpop.f32.mrf.mxu0
    %v1159 = vadd.f32 %v882, %v1158
    %v1160 = vpop.f32.mrf.mxu0
    %v1161 = vadd.f32 %v882, %v1160
    %1162 = vmatmul.bf16.gmra.mxu0 %v841
    %v1163 = vpop.f32.mrf.mxu0
    %v1164 = vadd.f32 %v882, %v1163
    %v1165 = vpop.f32.mrf.mxu0
    %v1166 = vadd.f32 %v882, %v1165
    %1167 = vmatmul.bf16.gmra.mxu0 %v842
    %v1168 = vpop.f32.mrf.mxu0
    %v1169 = vadd.f32 %v882, %v1168
    %v1170 = vpop.f32.mrf.mxu0
    %v1171 = vadd.f32 %v882, %v1170
    %1172 = vmatmul.bf16.gmra.mxu0 %v843
    %v1173 = vpop.f32.mrf.mxu0
    %v1174 = vadd.f32 %v882, %v1173
    %v1175 = vpop.f32.mrf.mxu0
    %v1176 = vadd.f32 %v882, %v1175
    %1177 = vmatmul.bf16.gmra.mxu0 %v844
    %v1178 = vpop.f32.mrf.mxu0
    %v1179 = vadd.f32 %v882, %v1178
    %v1180 = vpop.f32.mrf.mxu0
    %v1181 = vadd.f32 %v882, %v1180
    %1182 = vmatmul.bf16.gmra.mxu0 %v845
    %v1183 = vpop.f32.mrf.mxu0
    %v1184 = vadd.f32 %v882, %v1183
    %v1185 = vpop.f32.mrf.mxu0
    %v1186 = vadd.f32 %v882, %v1185
    %1187 = vmatmul.bf16.gmra.mxu0 %v846
    %v1188 = vpop.f32.mrf.mxu0
    %v1189 = vadd.f32 %v882, %v1188
    %v1190 = vpop.f32.mrf.mxu0
    %v1191 = vadd.f32 %v882, %v1190
    %1192 = vdwg.mxu0
    %1193 = vmatpush.bf16.msra.mxu0 %v990
    %1194 = vmatpush.bf16.msra.mxu0 %v987
    %1195 = vmatpush.bf16.msra.mxu0 %v984
    %1196 = vmatpush.bf16.msra.mxu0 %v981
    %1197 = vmatpush.bf16.msra.mxu0 %v978
    %1198 = vmatpush.bf16.msra.mxu0 %v975
    %1199 = vmatpush.bf16.msra.mxu0 %v972
    %1200 = vmatpush.bf16.msra.mxu0 %v969
    %1201 = vmatmul.bf16.gmra.mxu0 %v831
    %v1202 = vpop.f32.mrf.mxu0
    %v1203 = vadd.f32 %v883, %v1202
    %v1204 = vpop.f32.mrf.mxu0
    %v1205 = vadd.f32 %v883, %v1204
    %1206 = vmatmul.bf16.gmra.mxu0 %v832
    %v1207 = vpop.f32.mrf.mxu0
    %v1208 = vadd.f32 %v883, %v1207
    %v1209 = vpop.f32.mrf.mxu0
    %v1210 = vadd.f32 %v883, %v1209
    %1211 = vmatmul.bf16.gmra.mxu0 %v833
    %v1212 = vpop.f32.mrf.mxu0
    %v1213 = vadd.f32 %v883, %v1212
    %v1214 = vpop.f32.mrf.mxu0
    %v1215 = vadd.f32 %v883, %v1214
    %1216 = vmatmul.bf16.gmra.mxu0 %v834
    %v1217 = vpop.f32.mrf.mxu0
    %v1218 = vadd.f32 %v883, %v1217
    %v1219 = vpop.f32.mrf.mxu0
    %v1220 = vadd.f32 %v883, %v1219
    %1221 = vmatmul.bf16.gmra.mxu0 %v835
    %v1222 = vpop.f32.mrf.mxu0
    %v1223 = vadd.f32 %v883, %v1222
    %v1224 = vpop.f32.mrf.mxu0
    %v1225 = vadd.f32 %v883, %v1224
    %1226 = vmatmul.bf16.gmra.mxu0 %v836
    %v1227 = vpop.f32.mrf.mxu0
    %v1228 = vadd.f32 %v883, %v1227
    %v1229 = vpop.f32.mrf.mxu0
    %v1230 = vadd.f32 %v883, %v1229
    %1231 = vmatmul.bf16.gmra.mxu0 %v837
    %v1232 = vpop.f32.mrf.mxu0
    %v1233 = vadd.f32 %v883, %v1232
    %v1234 = vpop.f32.mrf.mxu0
    %v1235 = vadd.f32 %v883, %v1234
    %1236 = vmatmul.bf16.gmra.mxu0 %v838
    %v1237 = vpop.f32.mrf.mxu0
    %v1238 = vadd.f32 %v883, %v1237
    %v1239 = vpop.f32.mrf.mxu0
    %v1240 = vadd.f32 %v883, %v1239
    %1241 = vmatmul.bf16.gmra.mxu0 %v839
    %v1242 = vpop.f32.mrf.mxu0
    %v1243 = vadd.f32 %v883, %v1242
    %v1244 = vpop.f32.mrf.mxu0
    %v1245 = vadd.f32 %v883, %v1244
    %1246 = vmatmul.bf16.gmra.mxu0 %v840
    %v1247 = vpop.f32.mrf.mxu0
    %v1248 = vadd.f32 %v883, %v1247
    %v1249 = vpop.f32.mrf.mxu0
    %v1250 = vadd.f32 %v883, %v1249
    %1251 = vmatmul.bf16.gmra.mxu0 %v841
    %v1252 = vpop.f32.mrf.mxu0
    %v1253 = vadd.f32 %v883, %v1252
    %v1254 = vpop.f32.mrf.mxu0
    %v1255 = vadd.f32 %v883, %v1254
    %1256 = vmatmul.bf16.gmra.mxu0 %v842
    %v1257 = vpop.f32.mrf.mxu0
    %v1258 = vadd.f32 %v883, %v1257
    %v1259 = vpop.f32.mrf.mxu0
    %v1260 = vadd.f32 %v883, %v1259
    %1261 = vmatmul.bf16.gmra.mxu0 %v843
    %v1262 = vpop.f32.mrf.mxu0
    %v1263 = vadd.f32 %v883, %v1262
    %v1264 = vpop.f32.mrf.mxu0
    %v1265 = vadd.f32 %v883, %v1264
    %1266 = vmatmul.bf16.gmra.mxu0 %v844
    %v1267 = vpop.f32.mrf.mxu0
    %v1268 = vadd.f32 %v883, %v1267
    %v1269 = vpop.f32.mrf.mxu0
    %v1270 = vadd.f32 %v883, %v1269
    %1271 = vmatmul.bf16.gmra.mxu0 %v845
    %v1272 = vpop.f32.mrf.mxu0
    %v1273 = vadd.f32 %v883, %v1272
    %v1274 = vpop.f32.mrf.mxu0
    %v1275 = vadd.f32 %v883, %v1274
    %1276 = vmatmul.bf16.gmra.mxu0 %v846
    %v1277 = vpop.f32.mrf.mxu0
    %v1278 = vadd.f32 %v883, %v1277
    %v1279 = vpop.f32.mrf.mxu0
    %v1280 = vadd.f32 %v883, %v1279
    %1281 = vdwg.mxu0
    %v1282 = vpack.c.bf16 %v1114, %v1025
    %v1283 = vpack.c.bf16 %v1203, %v1203
    %v1284 = vpack.c.bf16 %v1116, %v1027
    %v1285 = vpack.c.bf16 %v1205, %v1205
    %v1286 = vpack.c.bf16 %v1119, %v1030
    %v1287 = vpack.c.bf16 %v1208, %v1208
    %v1288 = vpack.c.bf16 %v1121, %v1032
    %v1289 = vpack.c.bf16 %v1210, %v1210
    %v1290 = vpack.c.bf16 %v1124, %v1035
    %v1291 = vpack.c.bf16 %v1213, %v1213
    %v1292 = vpack.c.bf16 %v1126, %v1037
    %v1293 = vpack.c.bf16 %v1215, %v1215
    %v1294 = vpack.c.bf16 %v1129, %v1040
    %v1295 = vpack.c.bf16 %v1218, %v1218
    %v1296 = vpack.c.bf16 %v1131, %v1042
    %v1297 = vpack.c.bf16 %v1220, %v1220
    %v1298 = vpack.c.bf16 %v1134, %v1045
    %v1299 = vpack.c.bf16 %v1223, %v1223
    %v1300 = vpack.c.bf16 %v1136, %v1047
    %v1301 = vpack.c.bf16 %v1225, %v1225
    %v1302 = vpack.c.bf16 %v1139, %v1050
    %v1303 = vpack.c.bf16 %v1228, %v1228
    %v1304 = vpack.c.bf16 %v1141, %v1052
    %v1305 = vpack.c.bf16 %v1230, %v1230
    %v1306 = vpack.c.bf16 %v1144, %v1055
    %v1307 = vpack.c.bf16 %v1233, %v1233
    %v1308 = vpack.c.bf16 %v1146, %v1057
    %v1309 = vpack.c.bf16 %v1235, %v1235
    %v1310 = vpack.c.bf16 %v1149, %v1060
    %v1311 = vpack.c.bf16 %v1238, %v1238
    %v1312 = vpack.c.bf16 %v1151, %v1062
    %v1313 = vpack.c.bf16 %v1240, %v1240
    %v1314 = vpack.c.bf16 %v1154, %v1065
    %v1315 = vpack.c.bf16 %v1243, %v1243
    %v1316 = vpack.c.bf16 %v1156, %v1067
    %v1317 = vpack.c.bf16 %v1245, %v1245
    %v1318 = vpack.c.bf16 %v1159, %v1070
    %v1319 = vpack.c.bf16 %v1248, %v1248
    %v1320 = vpack.c.bf16 %v1161, %v1072
    %v1321 = vpack.c.bf16 %v1250, %v1250
    %v1322 = vpack.c.bf16 %v1164, %v1075
    %v1323 = vpack.c.bf16 %v1253, %v1253
    %v1324 = vpack.c.bf16 %v1166, %v1077
    %v1325 = vpack.c.bf16 %v1255, %v1255
    %v1326 = vpack.c.bf16 %v1169, %v1080
    %v1327 = vpack.c.bf16 %v1258, %v1258
    %v1328 = vpack.c.bf16 %v1171, %v1082
    %v1329 = vpack.c.bf16 %v1260, %v1260
    %v1330 = vpack.c.bf16 %v1174, %v1085
    %v1331 = vpack.c.bf16 %v1263, %v1263
    %v1332 = vpack.c.bf16 %v1176, %v1087
    %v1333 = vpack.c.bf16 %v1265, %v1265
    %v1334 = vpack.c.bf16 %v1179, %v1090
    %v1335 = vpack.c.bf16 %v1268, %v1268
    %v1336 = vpack.c.bf16 %v1181, %v1092
    %v1337 = vpack.c.bf16 %v1270, %v1270
    %v1338 = vpack.c.bf16 %v1184, %v1095
    %v1339 = vpack.c.bf16 %v1273, %v1273
    %v1340 = vpack.c.bf16 %v1186, %v1097
    %v1341 = vpack.c.bf16 %v1275, %v1275
    %v1342 = vpack.c.bf16 %v1189, %v1100
    %v1343 = vpack.c.bf16 %v1278, %v1278
    %v1344 = vpack.c.bf16 %v1191, %v1102
    %v1345 = vpack.c.bf16 %v1280, %v1280
    %1346 = vst [vmem:[#allocation10] sm:$0xff] %v1282
    %1347 = vst [vmem:[#allocation10 + $0x8] sm:$0xf] %v1283
    %1348 = vst [vmem:[#allocation10 + $0xc] sm:$0xff] %v1284
    %1349 = vst [vmem:[#allocation10 + $0x14] sm:$0xf] %v1285
    %1350 = vst [vmem:[#allocation10 + $0x18] sm:$0xff] %v1286
    %1351 = vst [vmem:[#allocation10 + $0x20] sm:$0xf] %v1287
    %1352 = vst [vmem:[#allocation10 + $0x24] sm:$0xff] %v1288
    %1353 = vst [vmem:[#allocation10 + $0x2c] sm:$0xf] %v1289
    %1354 = vst [vmem:[#allocation10 + $0x30] sm:$0xff] %v1290
    %1355 = vst [vmem:[#allocation10 + $0x38] sm:$0xf] %v1291
    %1356 = vst [vmem:[#allocation10 + $0x3c] sm:$0xff] %v1292
    %1357 = vst [vmem:[#allocation10 + $0x44] sm:$0xf] %v1293
    %1358 = vst [vmem:[#allocation10 + $0x48] sm:$0xff] %v1294
    %1359 = vst [vmem:[#allocation10 + $0x50] sm:$0xf] %v1295
    %1360 = vst [vmem:[#allocation10 + $0x54] sm:$0xff] %v1296
    %1361 = vst [vmem:[#allocation10 + $0x5c] sm:$0xf] %v1297
    %1362 = vst [vmem:[#allocation10 + $0x60] sm:$0xff] %v1298
    %1363 = vst [vmem:[#allocation10 + $0x68] sm:$0xf] %v1299
    %1364 = vst [vmem:[#allocation10 + $0x6c] sm:$0xff] %v1300
    %1365 = vst [vmem:[#allocation10 + $0x74] sm:$0xf] %v1301
    %1366 = vst [vmem:[#allocation10 + $0x78] sm:$0xff] %v1302
    %1367 = vst [vmem:[#allocation10 + $0x80] sm:$0xf] %v1303
    %1368 = vst [vmem:[#allocation10 + $0x84] sm:$0xff] %v1304
    %1369 = vst [vmem:[#allocation10 + $0x8c] sm:$0xf] %v1305
    %1370 = vst [vmem:[#allocation10 + $0x90] sm:$0xff] %v1306
    %1371 = vst [vmem:[#allocation10 + $0x98] sm:$0xf] %v1307
    %1372 = vst [vmem:[#allocation10 + $0x9c] sm:$0xff] %v1308
    %1373 = vst [vmem:[#allocation10 + $0xa4] sm:$0xf] %v1309
    %1374 = vst [vmem:[#allocation10 + $0xa8] sm:$0xff] %v1310
    %1375 = vst [vmem:[#allocation10 + $0xb0] sm:$0xf] %v1311
    %1376 = vst [vmem:[#allocation10 + $0xb4] sm:$0xff] %v1312
    %1377 = vst [vmem:[#allocation10 + $0xbc] sm:$0xf] %v1313
    %1378 = vst [vmem:[#allocation10 + $0xc0] sm:$0xff] %v1314
    %1379 = vst [vmem:[#allocation10 + $0xc8] sm:$0xf] %v1315
    %1380 = vst [vmem:[#allocation10 + $0xcc] sm:$0xff] %v1316
    %1381 = vst [vmem:[#allocation10 + $0xd4] sm:$0xf] %v1317
    %1382 = vst [vmem:[#allocation10 + $0xd8] sm:$0xff] %v1318
    %1383 = vst [vmem:[#allocation10 + $0xe0] sm:$0xf] %v1319
    %1384 = vst [vmem:[#allocation10 + $0xe4] sm:$0xff] %v1320
    %1385 = vst [vmem:[#allocation10 + $0xec] sm:$0xf] %v1321
    %1386 = vst [vmem:[#allocation10 + $0xf0] sm:$0xff] %v1322
    %1387 = vst [vmem:[#allocation10 + $0xf8] sm:$0xf] %v1323
    %1388 = vst [vmem:[#allocation10 + $0xfc] sm:$0xff] %v1324
    %1389 = vst [vmem:[#allocation10 + $0x104] sm:$0xf] %v1325
    %1390 = vst [vmem:[#allocation10 + $0x108] sm:$0xff] %v1326
    %1391 = vst [vmem:[#allocation10 + $0x110] sm:$0xf] %v1327
    %1392 = vst [vmem:[#allocation10 + $0x114] sm:$0xff] %v1328
    %1393 = vst [vmem:[#allocation10 + $0x11c] sm:$0xf] %v1329
    %1394 = vst [vmem:[#allocation10 + $0x120] sm:$0xff] %v1330
    %1395 = vst [vmem:[#allocation10 + $0x128] sm:$0xf] %v1331
    %1396 = vst [vmem:[#allocation10 + $0x12c] sm:$0xff] %v1332
    %1397 = vst [vmem:[#allocation10 + $0x134] sm:$0xf] %v1333
    %1398 = vst [vmem:[#allocation10 + $0x138] sm:$0xff] %v1334
    %1399 = vst [vmem:[#allocation10 + $0x140] sm:$0xf] %v1335
    %1400 = vst [vmem:[#allocation10 + $0x144] sm:$0xff] %v1336
    %1401 = vst [vmem:[#allocation10 + $0x14c] sm:$0xf] %v1337
    %1402 = vst [vmem:[#allocation10 + $0x150] sm:$0xff] %v1338
    %1403 = vst [vmem:[#allocation10 + $0x158] sm:$0xf] %v1339
    %1404 = vst [vmem:[#allocation10 + $0x15c] sm:$0xff] %v1340
    %1405 = vst [vmem:[#allocation10 + $0x164] sm:$0xf] %v1341
    %1406 = vst [vmem:[#allocation10 + $0x168] sm:$0xff] %v1342
    %1407 = vst [vmem:[#allocation10 + $0x170] sm:$0xf] %v1343
    %1408 = vst [vmem:[#allocation10 + $0x174] sm:$0xff] %v1344
    %1409 = vst [vmem:[#allocation10 + $0x17c] sm:$0xf] %v1345
    // Predicated region
    $region38: #{tpu_custom_call.1} parent=1 // pred_check
      _
    $region39: #{tpu_custom_call.1} parent=1 // pred_check_branch
      %1411 = sbr.rel (0) target = $region41
    $region40: #{tpu_custom_call.1} parent=1 // pred_region
      %1413 = vsyncadd [#allocation4], 0
      %s1414 = sshll.u32 [#allocation10], 4
      %s1415 = int_to_ptr.vmem [resolvable:$true] %s1414
      %s1416 = sshll.u32 %s5, 4
      %s1417 = int_to_ptr.hbm [resolvable:$true] %s1416
      %1422 = dma.vmem_to_hbm [thread:$0]  %s1415, 6144, %s1417, [#allocation4], 192, 192, 12
    $region41: #{tpu_custom_call.1} parent=1 // pred_fallthru
      _
    // Predicated region
    $region42: #{tpu_custom_call.1} parent=1 // pred_check
      _
    $region43: #{tpu_custom_call.1} parent=1 // pred_check_branch
      %1424 = sbr.rel (0) target = $region45
    $region44: #{tpu_custom_call.1} parent=1 // pred_region
      %1426 = dma.done [#allocation4], 6144
    $region45: #{tpu_custom_call.1} parent=1 // pred_fallthru
      _
    %1427 = vsyncpa [#allocation3], 1
    %1428 = vsyncpa [#allocation6], 1
    %1429 = vsyncpa [#allocation9], 1
    %1430 = vsyncpa [#allocation4], 1

</llo_original>
